<compile_context>
chip_gen: v7x
topology: tpu7x:2x2x1
jax: 0.10.0
libtpu: 0.0.40
codegen_flags: <defaults>
</compile_context>

<pallas_src>
import jax
import jax.numpy as jnp
import numpy as np
from jax.experimental import pallas as pl
from jax.experimental.pallas import tpu as pltpu

LANE = 128
SUBLANE = 8


def _round_up(x, m):
    return ((x + m - 1) // m) * m


# --------------------------------------------------------------------------
# Parameter construction (deterministic) and host-side packing
# --------------------------------------------------------------------------

def init_params(key, input_dim, hidden_units, output_dim, reduction_ratio=1):
    """Deterministic parameter init (shapes follow MaskBlock / SerialMaskNet)."""
    dims = [input_dim] + list(hidden_units)
    params = []
    for idx in range(len(dims) - 1):
        hid = dims[idx]
        out = dims[idx + 1]
        red = int(hid * reduction_ratio)
        key, k1, k2, k3, k4, k5 = jax.random.split(key, 6)
        w1 = jax.random.normal(k1, (input_dim, red), jnp.float32) * 0.1
        b1 = jax.random.normal(k2, (1, red), jnp.float32) * 0.01
        w2 = jax.random.normal(k3, (red, hid), jnp.float32) * 0.1
        b2 = jax.random.normal(k4, (1, hid), jnp.float32) * 0.01
        w3 = jax.random.normal(k5, (hid, out), jnp.float32) * 0.1
        gamma = jnp.ones((1, out), jnp.float32)
        beta = jnp.zeros((1, out), jnp.float32)
        params.extend([w1, b1, w2, b2, w3, gamma, beta])
    # final fc (output_dim is not None)
    key, kwf, kbf = jax.random.split(key, 3)
    wf = jax.random.normal(kwf, (dims[-1], output_dim), jnp.float32) * 0.1
    bf = jax.random.normal(kbf, (1, output_dim), jnp.float32) * 0.01
    params.extend([wf, bf])
    return params


def pack_params(params, num_blocks, out_dim):
    """Pack parameters into shape-class slabs.

    Returns (slabs, meta) with slabs:
      w1f  : (input_dim, sum_red)      bf16  fused mask-layer first Linear
      w2bd : (sum_red, sum_hid_pad)    bf16  block-diagonal second Linear
      w3   : (num_blocks, hmax, omax)  bf16  per-block hidden_layer Linear
      wf   : (last_dim, out_pad)       bf16  lane-padded final fc weight
      vec  : (3 + 2*nb, vpad)          f32   row0=b1f, row1=b2f,
                                             rows 2+2i/3+2i = gamma_i/beta_i,
                                             last row = padded fc bias
    """
    blocks = [params[7 * i:7 * i + 7] for i in range(num_blocks)]
    wf, bf = params[7 * num_blocks], params[7 * num_blocks + 1]

    input_dim = blocks[0][0].shape[0]
    reds = [b[0].shape[1] for b in blocks]          # w1: (input_dim, red)
    hids = [b[2].shape[1] for b in blocks]          # w2: (red, hid)
    outs = [b[4].shape[1] for b in blocks]          # w3: (hid, out)

    sum_red = sum(reds)                              # tight (no per-block slice of h_all)
    hid_pads = [_round_up(h, LANE) for h in hids]    # 128-aligned v_mask slices
    sum_hid_pad = sum(hid_pads)
    out_pad = _round_up(out_dim, LANE)

    # Fused first Linear (tight concat along the red axis).
    w1f = jnp.concatenate([b[0] for b in blocks], axis=1)         # (input_dim, sum_red)
    b1f = jnp.concatenate([b[1] for b in blocks], axis=1)         # (1, sum_red)

    # Block-diagonal second Linear; hid column offsets are 128-aligned.
    w2bd = jnp.zeros((sum_red, sum_hid_pad), jnp.float32)
    b2f = jnp.zeros((1, sum_hid_pad), jnp.float32)
    roff, coff = 0, 0
    for b, red, hid, hp in zip(blocks, reds, hids, hid_pads):
        w2bd = w2bd.at[roff:roff + red, coff:coff + hid].set(b[2])
        b2f = b2f.at[:, coff:coff + hid].set(b[3])
        roff += red
        coff += hp

    # Per-block third Linear (no bias) in one small padded slab.
    hmax = _round_up(max(hids), SUBLANE)
    omax = _round_up(max(outs), LANE)
    w3_slab = jnp.zeros((num_blocks, hmax, omax), jnp.float32)
    for i, b in enumerate(blocks):
        w3_slab = w3_slab.at[i, :hids[i], :outs[i]].set(b[4])

    # Final fc, lane-padded to a multiple of 128 for a dense output store.
    wf_pad = jnp.zeros((wf.shape[0], out_pad), jnp.float32).at[:, :out_dim].set(wf)
    bf_pad = jnp.zeros((1, out_pad), jnp.float32).at[:, :out_dim].set(bf)

    # f32 bias / gamma / beta slab.
    n_vec = 3 + 2 * num_blocks
    vpad = _round_up(max(sum_red, sum_hid_pad, max(outs), out_pad), LANE)
    vec_slab = jnp.zeros((n_vec, vpad), jnp.float32)
    vec_slab = vec_slab.at[0, :sum_red].set(b1f[0])
    vec_slab = vec_slab.at[1, :sum_hid_pad].set(b2f[0])
    for i, b in enumerate(blocks):
        vec_slab = vec_slab.at[2 + 2 * i, :outs[i]].set(b[5][0])
        vec_slab = vec_slab.at[3 + 2 * i, :outs[i]].set(b[6][0])
    vec_slab = vec_slab.at[n_vec - 1, :out_pad].set(bf_pad[0])

    slabs = dict(
        w1f=w1f.astype(jnp.bfloat16),
        w2bd=w2bd.astype(jnp.bfloat16),
        w3=w3_slab.astype(jnp.bfloat16),
        wf=wf_pad.astype(jnp.bfloat16),
        vec=vec_slab,
    )
    meta = dict(input_dim=input_dim, hids=hids, outs=outs, hid_pads=hid_pads,
                sum_red=sum_red, sum_hid_pad=sum_hid_pad, out_pad=out_pad)
    return slabs, meta


# --------------------------------------------------------------------------
# Kernel
# --------------------------------------------------------------------------

def _make_kernel(meta, num_blocks, eps=1e-5):
    input_dim = meta["input_dim"]
    sum_red = meta["sum_red"]
    sum_hid_pad = meta["sum_hid_pad"]
    out_pad = meta["out_pad"]
    hids = meta["hids"]
    outs = meta["outs"]
    hid_pads = meta["hid_pads"]
    n_vec = 3 + 2 * num_blocks

    def kernel(x_ref, w1_ref, w2_ref, w3_ref, wf_ref, vec_ref, out_ref):
        x = x_ref[...]                                          # (tb, D) f32
        xb = x.astype(jnp.bfloat16)

        # (1) Fused mask-layer first Linear + ReLU for ALL blocks (one MXU pass).
        h_all = jnp.maximum(
            jnp.dot(xb, w1_ref[...], preferred_element_type=jnp.float32)
            + vec_ref[0:1, :sum_red], 0.0)                      # (tb, sum_red) f32

        # (2) Block-diagonal second Linear -> every block's v_mask at once.
        #     Hoisted out of the serial chain (it only depends on X).
        vm_all = (jnp.dot(h_all.astype(jnp.bfloat16), w2_ref[...],
                          preferred_element_type=jnp.float32)
                  + vec_ref[1:2, :sum_hid_pad])                 # (tb, sum_hid_pad) f32

        # (3) Serial chain: hidden_layer matmul + LayerNorm + ReLU per block.
        v = x
        hid_off = 0
        for blk in range(num_blocks):
            hid, out = hids[blk], outs[blk]
            v_mask = vm_all[:, hid_off:hid_off + hid]           # 128-aligned lane slice
            hid_off += hid_pads[blk]
            z = jnp.dot((v_mask * v).astype(jnp.bfloat16),
                        w3_ref[blk, :hid, :out],                # direct ref window load
                        preferred_element_type=jnp.float32)
            # Single-pass LayerNorm statistics (sum & sum-of-squares, f32).
            inv_n = 1.0 / out
            mean = jnp.sum(z, axis=-1, keepdims=True) * inv_n
            ex2 = jnp.sum(z * z, axis=-1, keepdims=True) * inv_n
            var = jnp.maximum(ex2 - mean * mean, 0.0)
            zn = (z - mean) * jax.lax.rsqrt(var + eps)
            gamma = vec_ref[2 + 2 * blk:3 + 2 * blk, :out]
            beta = vec_ref[3 + 2 * blk:4 + 2 * blk, :out]
            v = jnp.maximum(zn * gamma + beta, 0.0)
            # TODO(synk): dropout_rate=0 in this config, so nn.Dropout is a no-op.

        # (4) Final fc, lane-padded to out_pad -> dense (tb, out_pad) store.
        y = (jnp.dot(v.astype(jnp.bfloat16), wf_ref[...],
                     preferred_element_type=jnp.float32)
             + vec_ref[n_vec - 1:n_vec, :out_pad])
        out_ref[...] = y.astype(out_ref.dtype)
        # output_activation=None -> identity.

    return kernel


# --------------------------------------------------------------------------
# Tiling heuristics + pallas_call wrapper
# --------------------------------------------------------------------------

def _device_info():
    kind = ""
    try:
        kind = jax.devices()[0].device_kind.lower()
    except Exception:
        pass
    multi_tc = "v7" in kind        # 2 TensorCores/chip -> want >=2 parallel steps
    try:
        vmem = int(getattr(pltpu.get_tpu_info(), "vmem_capacity_bytes", 0)) or 0
    except Exception:
        vmem = 0
    if vmem <= 0:
        vmem = (64 << 20) if multi_tc else (128 << 20)
    return multi_tc, vmem


def _auto_tb(batch, row_bytes, slab_bytes):
    """Largest batch tile that divides `batch`, fits a VMEM budget, and keeps
    >=2 'parallel' grid steps on 2-TensorCore chips (single step is fine on
    single-TC v5e/v6e)."""
    multi_tc, vmem = _device_info()
    budget = vmem // 3                      # headroom for compiler scratch
    cap = 512 if multi_tc else 1024
    min_steps = 2 if multi_tc else 1
    for tb in (2048, 1024, 512, 256, 128, 64, 32, 16, 8):
        if tb > cap or batch % tb:
            continue
        if batch // tb < min_steps:
            continue
        if 2 * tb * row_bytes + slab_bytes > budget:   # in/out tiles double-buffered
            continue
        return tb
    return batch                            # fallback: one full-batch step


def _param_spec(shape, single_buffer):
    """Grid-invariant parameter BlockSpec (optionally single-buffered)."""
    zeros = (0,) * len(shape)
    kwargs = {}
    if single_buffer and hasattr(pl, "Buffered"):
        kwargs["pipeline_mode"] = pl.Buffered(buffer_count=1)
    return pl.BlockSpec(shape, lambda i, _z=zeros: _z, **kwargs)


def serial_masknet_pallas(x, params, num_blocks, out_dim, tb=None, eps=1e-5):
    B, input_dim = x.shape
    slabs, meta = pack_params(params, num_blocks, out_dim)
    slab_list = [slabs["w1f"], slabs["w2bd"], slabs["w3"], slabs["wf"], slabs["vec"]]
    slab_bytes = int(sum(s.size * s.dtype.itemsize for s in slab_list))
    out_pad = meta["out_pad"]

    if tb is None:
        tb = _auto_tb(B, (input_dim + out_pad) * 4, slab_bytes)
    assert B % tb == 0, "batch must be divisible by the batch tile"

    kernel = _make_kernel(meta, num_blocks, eps)

    # Scheduling hint for XLA around the custom call.
    hids, outs = meta["hids"], meta["outs"]
    flops = 2 * B * (input_dim * meta["sum_red"]
                     + meta["sum_red"] * meta["sum_hid_pad"]
                     + sum(h * o for h, o in zip(hids, outs))
                     + outs[-1] * out_pad)
    bytes_accessed = int(x.size * x.dtype.itemsize + slab_bytes + B * out_pad * 4)
    cost = pl.CostEstimate(flops=int(flops),
                           transcendentals=int(B * num_blocks),
                           bytes_accessed=bytes_accessed)

    # Explicit VMEM budget (v7x-safe: capped at 64 MiB physical).
    tile_bytes = 2 * tb * (input_dim + out_pad) * 4
    vmem_limit = int(min(max(slab_bytes + tile_bytes + (4 << 20), 16 << 20), 64 << 20))

    def _build(single_buffer):
        in_specs = [pl.BlockSpec((tb, input_dim), lambda i: (i, 0))]
        in_specs += [_param_spec(s.shape, single_buffer) for s in slab_list]
        # NOTE: output stays f32 lane-padded to 128 for a dense vst; for huge-B /
        # tiny-out_dim serving, a bf16 store would halve the writeback bytes.
        return pl.pallas_call(
            kernel,
            out_shape=jax.ShapeDtypeStruct((B, out_pad), jnp.float32),
            grid_spec=pl.GridSpec(
                grid=(B // tb,),
                in_specs=in_specs,
                out_specs=pl.BlockSpec((tb, out_pad), lambda i: (i, 0)),
            ),
            compiler_params=pltpu.CompilerParams(
                dimension_semantics=("parallel",),
                vmem_limit_bytes=vmem_limit),
            cost_estimate=cost,
        )

    def _run(single_buffer):
        return jax.block_until_ready(_build(single_buffer)(x, *slab_list))

    try:
        out_padded = _run(True)
    except Exception:
        # pl.Buffered(1) not supported by this jax version -> default buffering.
        out_padded = _run(False)

    # Strip the lane padding so callers only see the real output columns.
    return out_padded[:, :out_dim]


# --------------------------------------------------------------------------
# Pure-JAX reference (mirrors the PyTorch forward, all f32)
# --------------------------------------------------------------------------

def serial_masknet_ref(x, params, num_blocks, eps=1e-5):
    v = x
    i = 0
    for _ in range(num_blocks):
        w1, b1, w2, b2, w3, gamma, beta = params[i:i + 7]
        i += 7
        h = jnp.maximum(x @ w1 + b1, 0.0)
        v_mask = h @ w2 + b2
        z = (v_mask * v) @ w3
        mean = jnp.mean(z, axis=-1, keepdims=True)
        var = jnp.mean(jnp.square(z - mean), axis=-1, keepdims=True)
        zn = (z - mean) / jnp.sqrt(var + eps)
        v = jnp.maximum(zn * gamma + beta, 0.0)
    wf, bf = params[i:i + 2]
    return v @ wf + bf


if __name__ == "__main__":
    # Config: SerialMaskNet(input_dim=32, output_dim=4, hidden_units=[32, 16],
    #                       hidden_activations='ReLU', reduction_ratio=1,
    #                       dropout_rates=0, layer_norm=True)
    B = 32
    input_dim = 32
    hidden_units = [32, 16]
    output_dim = 4
    num_blocks = len(hidden_units)

    key = jax.random.PRNGKey(0)
    kx, kp = jax.random.split(key)
    x = jax.random.normal(kx, (B, input_dim), jnp.float32)
    params = init_params(kp, input_dim, hidden_units, output_dim)

    out = serial_masknet_pallas(x, params, num_blocks, output_dim)
    out = jax.block_until_ready(out)

    ref = serial_masknet_ref(x, params, num_blocks)
    # Kernel uses bf16 MXU operands (f32 accumulation / LayerNorm), so compare
    # against the f32 reference with a correspondingly loose tolerance.
    np.testing.assert_allclose(np.asarray(out), np.asarray(ref), rtol=5e-2, atol=5e-2)

    print("KERNEL_OK")
</pallas_src>

<mosaic_0001>
module attributes {stable_mosaic.version = 11 : i64} {
  func.func @kernel(%arg0: i32, %arg1: memref<32x32xf32, #tpu.memory_space<vmem>>, %arg2: memref<32x64xbf16, #tpu.memory_space<vmem>>, %arg3: memref<64x256xbf16, #tpu.memory_space<vmem>>, %arg4: memref<2x32x128xbf16, #tpu.memory_space<vmem>>, %arg5: memref<16x128xbf16, #tpu.memory_space<vmem>>, %arg6: memref<7x256xf32, #tpu.memory_space<vmem>>, %arg7: memref<32x128xf32, #tpu.memory_space<vmem>>) attributes {dimension_semantics = [#tpu.dimension_semantics<parallel>], iteration_bounds = array<i64: 1>, scalar_prefetch = 0 : i64, scratch_operands = 0 : i64, tpu.core_type = #tpu.core_type<tc>, window_params = [{transform_indices = @transform_0, window_bounds = array<i64: 32, 32>}, {pipeline_mode = #tpu.pipeline_mode<synchronous>, transform_indices = @transform_1, window_bounds = array<i64: 32, 64>}, {pipeline_mode = #tpu.pipeline_mode<synchronous>, transform_indices = @transform_2, window_bounds = array<i64: 64, 256>}, {pipeline_mode = #tpu.pipeline_mode<synchronous>, transform_indices = @transform_3, window_bounds = array<i64: 2, 32, 128>}, {pipeline_mode = #tpu.pipeline_mode<synchronous>, transform_indices = @transform_4, window_bounds = array<i64: 16, 128>}, {pipeline_mode = #tpu.pipeline_mode<synchronous>, transform_indices = @transform_5, window_bounds = array<i64: 7, 256>}, {transform_indices = @transform_6, window_bounds = array<i64: 32, 128>}]} {
    %c0 = arith.constant 0 : index
    %c0_0 = arith.constant 0 : index
    %0 = vector.load %arg1[%c0, %c0_0] : memref<32x32xf32, #tpu.memory_space<vmem>>, vector<32x32xf32>
    %1 = arith.truncf %0 : vector<32x32xf32> to vector<32x32xbf16>
    %c0_1 = arith.constant 0 : index
    %c0_2 = arith.constant 0 : index
    %2 = vector.load %arg2[%c0_1, %c0_2] : memref<32x64xbf16, #tpu.memory_space<vmem>>, vector<32x64xbf16>
    %cst = arith.constant dense<0.000000e+00> : vector<32x64xf32>
    %3 = tpu.matmul %1, %2, %cst {dimension_numbers = #tpu.dot_dimension_numbers<[1], [0], [0], [1], [0, 0, 1, 1], [], []>} : vector<32x32xbf16>, vector<32x64xbf16>, vector<32x64xf32> -> vector<32x64xf32>
    %c0_3 = arith.constant 0 : index
    %c0_4 = arith.constant 0 : index
    %4 = vector.load %arg6[%c0_3, %c0_4] : memref<7x256xf32, #tpu.memory_space<vmem>>, vector<1x64xf32>
    %5 = vector.broadcast %4 : vector<1x64xf32> to vector<32x64xf32>
    %6 = arith.addf %3, %5 : vector<32x64xf32>
    %cst_5 = arith.constant 0.000000e+00 : f32
    %7 = vector.broadcast %cst_5 : f32 to vector<32x64xf32>
    %8 = arith.maximumf %6, %7 : vector<32x64xf32>
    %9 = arith.truncf %8 : vector<32x64xf32> to vector<32x64xbf16>
    %c0_6 = arith.constant 0 : index
    %c0_7 = arith.constant 0 : index
    %10 = vector.load %arg3[%c0_6, %c0_7] : memref<64x256xbf16, #tpu.memory_space<vmem>>, vector<64x256xbf16>
    %cst_8 = arith.constant dense<0.000000e+00> : vector<32x256xf32>
    %11 = tpu.matmul %9, %10, %cst_8 {dimension_numbers = #tpu.dot_dimension_numbers<[1], [0], [0], [1], [0, 0, 1, 1], [], []>} : vector<32x64xbf16>, vector<64x256xbf16>, vector<32x256xf32> -> vector<32x256xf32>
    %c1 = arith.constant 1 : index
    %c0_9 = arith.constant 0 : index
    %12 = vector.load %arg6[%c1, %c0_9] : memref<7x256xf32, #tpu.memory_space<vmem>>, vector<1x256xf32>
    %13 = vector.broadcast %12 : vector<1x256xf32> to vector<32x256xf32>
    %14 = arith.addf %11, %13 : vector<32x256xf32>
    %15 = vector.extract_strided_slice %14 {offsets = [0, 0], sizes = [32, 32], strides = [1, 1]} : vector<32x256xf32> to vector<32x32xf32>
    %16 = arith.mulf %15, %0 : vector<32x32xf32>
    %17 = arith.truncf %16 : vector<32x32xf32> to vector<32x32xbf16>
    %c0_10 = arith.constant 0 : index
    %c0_11 = arith.constant 0 : index
    %c0_12 = arith.constant 0 : index
    %18 = vector.load %arg4[%c0_10, %c0_11, %c0_12] : memref<2x32x128xbf16, #tpu.memory_space<vmem>>, vector<1x32x32xbf16>
    %19 = vector.shape_cast %18 : vector<1x32x32xbf16> to vector<32x32xbf16>
    %cst_13 = arith.constant dense<0.000000e+00> : vector<32x32xf32>
    %20 = tpu.matmul %17, %19, %cst_13 {dimension_numbers = #tpu.dot_dimension_numbers<[1], [0], [0], [1], [0, 0, 1, 1], [], []>} : vector<32x32xbf16>, vector<32x32xbf16>, vector<32x32xf32> -> vector<32x32xf32>
    %cst_14 = arith.constant dense<0.000000e+00> : vector<32xf32>
    %21 = vector.multi_reduction <add>, %20, %cst_14 [1] : vector<32x32xf32> to vector<32xf32>
    %22 = vector.shape_cast %21 : vector<32xf32> to vector<32x1xf32>
    %cst_15 = arith.constant 3.125000e-02 : f32
    %23 = vector.broadcast %cst_15 : f32 to vector<32x1xf32>
    %24 = arith.mulf %22, %23 : vector<32x1xf32>
    %25 = arith.mulf %20, %20 : vector<32x32xf32>
    %cst_16 = arith.constant dense<0.000000e+00> : vector<32xf32>
    %26 = vector.multi_reduction <add>, %25, %cst_16 [1] : vector<32x32xf32> to vector<32xf32>
    %27 = vector.shape_cast %26 : vector<32xf32> to vector<32x1xf32>
    %cst_17 = arith.constant 3.125000e-02 : f32
    %28 = vector.broadcast %cst_17 : f32 to vector<32x1xf32>
    %29 = arith.mulf %27, %28 : vector<32x1xf32>
    %30 = arith.mulf %24, %24 : vector<32x1xf32>
    %31 = arith.subf %29, %30 : vector<32x1xf32>
    %cst_18 = arith.constant 0.000000e+00 : f32
    %32 = vector.broadcast %cst_18 : f32 to vector<32x1xf32>
    %33 = arith.maximumf %31, %32 : vector<32x1xf32>
    %34 = vector.broadcast %24 : vector<32x1xf32> to vector<32x32xf32>
    %35 = arith.subf %20, %34 : vector<32x32xf32>
    %cst_19 = arith.constant 9.99999974E-6 : f32
    %36 = vector.broadcast %cst_19 : f32 to vector<32x1xf32>
    %37 = arith.addf %33, %36 : vector<32x1xf32>
    %38 = math.rsqrt %37 : vector<32x1xf32>
    %39 = vector.broadcast %38 : vector<32x1xf32> to vector<32x32xf32>
    %40 = arith.mulf %35, %39 : vector<32x32xf32>
    %c2 = arith.constant 2 : index
    %c0_20 = arith.constant 0 : index
    %41 = vector.load %arg6[%c2, %c0_20] : memref<7x256xf32, #tpu.memory_space<vmem>>, vector<1x32xf32>
    %c3 = arith.constant 3 : index
    %c0_21 = arith.constant 0 : index
    %42 = vector.load %arg6[%c3, %c0_21] : memref<7x256xf32, #tpu.memory_space<vmem>>, vector<1x32xf32>
    %43 = vector.broadcast %41 : vector<1x32xf32> to vector<32x32xf32>
    %44 = arith.mulf %40, %43 : vector<32x32xf32>
    %45 = vector.broadcast %42 : vector<1x32xf32> to vector<32x32xf32>
    %46 = arith.addf %44, %45 : vector<32x32xf32>
    %cst_22 = arith.constant 0.000000e+00 : f32
    %47 = vector.broadcast %cst_22 : f32 to vector<32x32xf32>
    %48 = arith.maximumf %46, %47 : vector<32x32xf32>
    %49 = vector.extract_strided_slice %14 {offsets = [0, 128], sizes = [32, 32], strides = [1, 1]} : vector<32x256xf32> to vector<32x32xf32>
    %50 = arith.mulf %49, %48 : vector<32x32xf32>
    %51 = arith.truncf %50 : vector<32x32xf32> to vector<32x32xbf16>
    %c1_23 = arith.constant 1 : index
    %c0_24 = arith.constant 0 : index
    %c0_25 = arith.constant 0 : index
    %52 = vector.load %arg4[%c1_23, %c0_24, %c0_25] : memref<2x32x128xbf16, #tpu.memory_space<vmem>>, vector<1x32x16xbf16>
    %53 = vector.shape_cast %52 : vector<1x32x16xbf16> to vector<32x16xbf16>
    %cst_26 = arith.constant dense<0.000000e+00> : vector<32x16xf32>
    %54 = tpu.matmul %51, %53, %cst_26 {dimension_numbers = #tpu.dot_dimension_numbers<[1], [0], [0], [1], [0, 0, 1, 1], [], []>} : vector<32x32xbf16>, vector<32x16xbf16>, vector<32x16xf32> -> vector<32x16xf32>
    %cst_27 = arith.constant dense<0.000000e+00> : vector<32xf32>
    %55 = vector.multi_reduction <add>, %54, %cst_27 [1] : vector<32x16xf32> to vector<32xf32>
    %56 = vector.shape_cast %55 : vector<32xf32> to vector<32x1xf32>
    %cst_28 = arith.constant 6.250000e-02 : f32
    %57 = vector.broadcast %cst_28 : f32 to vector<32x1xf32>
    %58 = arith.mulf %56, %57 : vector<32x1xf32>
    %59 = arith.mulf %54, %54 : vector<32x16xf32>
    %cst_29 = arith.constant dense<0.000000e+00> : vector<32xf32>
    %60 = vector.multi_reduction <add>, %59, %cst_29 [1] : vector<32x16xf32> to vector<32xf32>
    %61 = vector.shape_cast %60 : vector<32xf32> to vector<32x1xf32>
    %cst_30 = arith.constant 6.250000e-02 : f32
    %62 = vector.broadcast %cst_30 : f32 to vector<32x1xf32>
    %63 = arith.mulf %61, %62 : vector<32x1xf32>
    %64 = arith.mulf %58, %58 : vector<32x1xf32>
    %65 = arith.subf %63, %64 : vector<32x1xf32>
    %cst_31 = arith.constant 0.000000e+00 : f32
    %66 = vector.broadcast %cst_31 : f32 to vector<32x1xf32>
    %67 = arith.maximumf %65, %66 : vector<32x1xf32>
    %68 = vector.broadcast %58 : vector<32x1xf32> to vector<32x16xf32>
    %69 = arith.subf %54, %68 : vector<32x16xf32>
    %cst_32 = arith.constant 9.99999974E-6 : f32
    %70 = vector.broadcast %cst_32 : f32 to vector<32x1xf32>
    %71 = arith.addf %67, %70 : vector<32x1xf32>
    %72 = math.rsqrt %71 : vector<32x1xf32>
    %73 = vector.broadcast %72 : vector<32x1xf32> to vector<32x16xf32>
    %74 = arith.mulf %69, %73 : vector<32x16xf32>
    %c4 = arith.constant 4 : index
    %c0_33 = arith.constant 0 : index
    %75 = vector.load %arg6[%c4, %c0_33] : memref<7x256xf32, #tpu.memory_space<vmem>>, vector<1x16xf32>
    %c5 = arith.constant 5 : index
    %c0_34 = arith.constant 0 : index
    %76 = vector.load %arg6[%c5, %c0_34] : memref<7x256xf32, #tpu.memory_space<vmem>>, vector<1x16xf32>
    %77 = vector.broadcast %75 : vector<1x16xf32> to vector<32x16xf32>
    %78 = arith.mulf %74, %77 : vector<32x16xf32>
    %79 = vector.broadcast %76 : vector<1x16xf32> to vector<32x16xf32>
    %80 = arith.addf %78, %79 : vector<32x16xf32>
    %cst_35 = arith.constant 0.000000e+00 : f32
    %81 = vector.broadcast %cst_35 : f32 to vector<32x16xf32>
    %82 = arith.maximumf %80, %81 : vector<32x16xf32>
    %83 = arith.truncf %82 : vector<32x16xf32> to vector<32x16xbf16>
    %c0_36 = arith.constant 0 : index
    %c0_37 = arith.constant 0 : index
    %84 = vector.load %arg5[%c0_36, %c0_37] : memref<16x128xbf16, #tpu.memory_space<vmem>>, vector<16x128xbf16>
    %cst_38 = arith.constant dense<0.000000e+00> : vector<32x128xf32>
    %85 = tpu.matmul %83, %84, %cst_38 {dimension_numbers = #tpu.dot_dimension_numbers<[1], [0], [0], [1], [0, 0, 1, 1], [], []>} : vector<32x16xbf16>, vector<16x128xbf16>, vector<32x128xf32> -> vector<32x128xf32>
    %c6 = arith.constant 6 : index
    %c0_39 = arith.constant 0 : index
    %86 = vector.load %arg6[%c6, %c0_39] : memref<7x256xf32, #tpu.memory_space<vmem>>, vector<1x128xf32>
    %87 = vector.broadcast %86 : vector<1x128xf32> to vector<32x128xf32>
    %88 = arith.addf %85, %87 : vector<32x128xf32>
    %c0_40 = arith.constant 0 : index
    %c0_41 = arith.constant 0 : index
    %89 = vector.load %arg7[%c0_40, %c0_41] : memref<32x128xf32, #tpu.memory_space<vmem>>, vector<32x128xf32>
    tpu.vector_store %arg7[%c0_40, %c0_41], %88 {strides = array<i32>} : memref<32x128xf32, #tpu.memory_space<vmem>>, vector<32x128xf32>,
    return
  }
  func.func @transform_0(%arg0: i32) -> (i32, i32) {
    %c0_i32 = arith.constant 0 : i32
    %c0_i32_0 = arith.constant 0 : i32
    return %arg0, %c0_i32 : i32, i32
  }
  func.func @transform_1(%arg0: i32) -> (i32, i32) {
    %c0_i32 = arith.constant 0 : i32
    %c0_i32_0 = arith.constant 0 : i32
    %c0_i32_1 = arith.constant 0 : i32
    return %c0_i32, %c0_i32_0 : i32, i32
  }
  func.func @transform_2(%arg0: i32) -> (i32, i32) {
    %c0_i32 = arith.constant 0 : i32
    %c0_i32_0 = arith.constant 0 : i32
    %c0_i32_1 = arith.constant 0 : i32
    return %c0_i32, %c0_i32_0 : i32, i32
  }
  func.func @transform_3(%arg0: i32) -> (i32, i32, i32) {
    %c0_i32 = arith.constant 0 : i32
    %c0_i32_0 = arith.constant 0 : i32
    %c0_i32_1 = arith.constant 0 : i32
    %c0_i32_2 = arith.constant 0 : i32
    return %c0_i32, %c0_i32_0, %c0_i32_1 : i32, i32, i32
  }
  func.func @transform_4(%arg0: i32) -> (i32, i32) {
    %c0_i32 = arith.constant 0 : i32
    %c0_i32_0 = arith.constant 0 : i32
    %c0_i32_1 = arith.constant 0 : i32
    return %c0_i32, %c0_i32_0 : i32, i32
  }
  func.func @transform_5(%arg0: i32) -> (i32, i32) {
    %c0_i32 = arith.constant 0 : i32
    %c0_i32_0 = arith.constant 0 : i32
    %c0_i32_1 = arith.constant 0 : i32
    return %c0_i32, %c0_i32_0 : i32, i32
  }
  func.func @transform_6(%arg0: i32) -> (i32, i32) {
    %c0_i32 = arith.constant 0 : i32
    %c0_i32_0 = arith.constant 0 : i32
    return %arg0, %c0_i32 : i32, i32
  }
}

module attributes {stable_mosaic.version = 11 : i64} {
  func.func @kernel(%arg0: i32, %arg1: memref<32x32xf32, #tpu.memory_space<vmem>>, %arg2: memref<32x64xbf16, #tpu.memory_space<vmem>>, %arg3: memref<64x256xbf16, #tpu.memory_space<vmem>>, %arg4: memref<2x32x128xbf16, #tpu.memory_space<vmem>>, %arg5: memref<16x128xbf16, #tpu.memory_space<vmem>>, %arg6: memref<7x256xf32, #tpu.memory_space<vmem>>, %arg7: memref<32x128xf32, #tpu.memory_space<vmem>>) attributes {dimension_semantics = [#tpu.dimension_semantics<parallel>], iteration_bounds = array<i64: 1>, scalar_prefetch = 0 : i64, scratch_operands = 0 : i64, tpu.core_type = #tpu.core_type<tc>, window_params = [{transform_indices = @transform_0, window_bounds = array<i64: 32, 32>}, {pipeline_mode = #tpu.pipeline_mode<synchronous>, transform_indices = @transform_1, window_bounds = array<i64: 32, 64>}, {pipeline_mode = #tpu.pipeline_mode<synchronous>, transform_indices = @transform_2, window_bounds = array<i64: 64, 256>}, {pipeline_mode = #tpu.pipeline_mode<synchronous>, transform_indices = @transform_3, window_bounds = array<i64: 2, 32, 128>}, {pipeline_mode = #tpu.pipeline_mode<synchronous>, transform_indices = @transform_4, window_bounds = array<i64: 16, 128>}, {pipeline_mode = #tpu.pipeline_mode<synchronous>, transform_indices = @transform_5, window_bounds = array<i64: 7, 256>}, {transform_indices = @transform_6, window_bounds = array<i64: 32, 128>}]} {
    %c0 = arith.constant 0 : index
    %c0_0 = arith.constant 0 : index
    %0 = vector.load %arg1[%c0, %c0_0] : memref<32x32xf32, #tpu.memory_space<vmem>>, vector<32x32xf32>
    %1 = arith.truncf %0 : vector<32x32xf32> to vector<32x32xbf16>
    %c0_1 = arith.constant 0 : index
    %c0_2 = arith.constant 0 : index
    %2 = vector.load %arg2[%c0_1, %c0_2] : memref<32x64xbf16, #tpu.memory_space<vmem>>, vector<32x64xbf16>
    %cst = arith.constant dense<0.000000e+00> : vector<32x64xf32>
    %3 = tpu.matmul %1, %2, %cst {dimension_numbers = #tpu.dot_dimension_numbers<[1], [0], [0], [1], [0, 0, 1, 1], [], []>} : vector<32x32xbf16>, vector<32x64xbf16>, vector<32x64xf32> -> vector<32x64xf32>
    %c0_3 = arith.constant 0 : index
    %c0_4 = arith.constant 0 : index
    %4 = vector.load %arg6[%c0_3, %c0_4] : memref<7x256xf32, #tpu.memory_space<vmem>>, vector<1x64xf32>
    %5 = vector.broadcast %4 : vector<1x64xf32> to vector<32x64xf32>
    %6 = arith.addf %3, %5 : vector<32x64xf32>
    %cst_5 = arith.constant 0.000000e+00 : f32
    %7 = vector.broadcast %cst_5 : f32 to vector<32x64xf32>
    %8 = arith.maximumf %6, %7 : vector<32x64xf32>
    %9 = arith.truncf %8 : vector<32x64xf32> to vector<32x64xbf16>
    %c0_6 = arith.constant 0 : index
    %c0_7 = arith.constant 0 : index
    %10 = vector.load %arg3[%c0_6, %c0_7] : memref<64x256xbf16, #tpu.memory_space<vmem>>, vector<64x256xbf16>
    %cst_8 = arith.constant dense<0.000000e+00> : vector<32x256xf32>
    %11 = tpu.matmul %9, %10, %cst_8 {dimension_numbers = #tpu.dot_dimension_numbers<[1], [0], [0], [1], [0, 0, 1, 1], [], []>} : vector<32x64xbf16>, vector<64x256xbf16>, vector<32x256xf32> -> vector<32x256xf32>
    %c1 = arith.constant 1 : index
    %c0_9 = arith.constant 0 : index
    %12 = vector.load %arg6[%c1, %c0_9] : memref<7x256xf32, #tpu.memory_space<vmem>>, vector<1x256xf32>
    %13 = vector.broadcast %12 : vector<1x256xf32> to vector<32x256xf32>
    %14 = arith.addf %11, %13 : vector<32x256xf32>
    %15 = vector.extract_strided_slice %14 {offsets = [0, 0], sizes = [32, 32], strides = [1, 1]} : vector<32x256xf32> to vector<32x32xf32>
    %16 = arith.mulf %15, %0 : vector<32x32xf32>
    %17 = arith.truncf %16 : vector<32x32xf32> to vector<32x32xbf16>
    %c0_10 = arith.constant 0 : index
    %c0_11 = arith.constant 0 : index
    %c0_12 = arith.constant 0 : index
    %18 = vector.load %arg4[%c0_10, %c0_11, %c0_12] : memref<2x32x128xbf16, #tpu.memory_space<vmem>>, vector<1x32x32xbf16>
    %19 = vector.shape_cast %18 : vector<1x32x32xbf16> to vector<32x32xbf16>
    %cst_13 = arith.constant dense<0.000000e+00> : vector<32x32xf32>
    %20 = tpu.matmul %17, %19, %cst_13 {dimension_numbers = #tpu.dot_dimension_numbers<[1], [0], [0], [1], [0, 0, 1, 1], [], []>} : vector<32x32xbf16>, vector<32x32xbf16>, vector<32x32xf32> -> vector<32x32xf32>
    %cst_14 = arith.constant dense<0.000000e+00> : vector<32xf32>
    %21 = vector.multi_reduction <add>, %20, %cst_14 [1] : vector<32x32xf32> to vector<32xf32>
    %22 = vector.shape_cast %21 : vector<32xf32> to vector<32x1xf32>
    %cst_15 = arith.constant 3.125000e-02 : f32
    %23 = vector.broadcast %cst_15 : f32 to vector<32x1xf32>
    %24 = arith.mulf %22, %23 : vector<32x1xf32>
    %25 = arith.mulf %20, %20 : vector<32x32xf32>
    %cst_16 = arith.constant dense<0.000000e+00> : vector<32xf32>
    %26 = vector.multi_reduction <add>, %25, %cst_16 [1] : vector<32x32xf32> to vector<32xf32>
    %27 = vector.shape_cast %26 : vector<32xf32> to vector<32x1xf32>
    %cst_17 = arith.constant 3.125000e-02 : f32
    %28 = vector.broadcast %cst_17 : f32 to vector<32x1xf32>
    %29 = arith.mulf %27, %28 : vector<32x1xf32>
    %30 = arith.mulf %24, %24 : vector<32x1xf32>
    %31 = arith.subf %29, %30 : vector<32x1xf32>
    %cst_18 = arith.constant 0.000000e+00 : f32
    %32 = vector.broadcast %cst_18 : f32 to vector<32x1xf32>
    %33 = arith.maximumf %31, %32 : vector<32x1xf32>
    %34 = vector.broadcast %24 : vector<32x1xf32> to vector<32x32xf32>
    %35 = arith.subf %20, %34 : vector<32x32xf32>
    %cst_19 = arith.constant 9.99999974E-6 : f32
    %36 = vector.broadcast %cst_19 : f32 to vector<32x1xf32>
    %37 = arith.addf %33, %36 : vector<32x1xf32>
    %38 = math.rsqrt %37 : vector<32x1xf32>
    %39 = vector.broadcast %38 : vector<32x1xf32> to vector<32x32xf32>
    %40 = arith.mulf %35, %39 : vector<32x32xf32>
    %c2 = arith.constant 2 : index
    %c0_20 = arith.constant 0 : index
    %41 = vector.load %arg6[%c2, %c0_20] : memref<7x256xf32, #tpu.memory_space<vmem>>, vector<1x32xf32>
    %c3 = arith.constant 3 : index
    %c0_21 = arith.constant 0 : index
    %42 = vector.load %arg6[%c3, %c0_21] : memref<7x256xf32, #tpu.memory_space<vmem>>, vector<1x32xf32>
    %43 = vector.broadcast %41 : vector<1x32xf32> to vector<32x32xf32>
    %44 = arith.mulf %40, %43 : vector<32x32xf32>
    %45 = vector.broadcast %42 : vector<1x32xf32> to vector<32x32xf32>
    %46 = arith.addf %44, %45 : vector<32x32xf32>
    %cst_22 = arith.constant 0.000000e+00 : f32
    %47 = vector.broadcast %cst_22 : f32 to vector<32x32xf32>
    %48 = arith.maximumf %46, %47 : vector<32x32xf32>
    %49 = vector.extract_strided_slice %14 {offsets = [0, 128], sizes = [32, 32], strides = [1, 1]} : vector<32x256xf32> to vector<32x32xf32>
    %50 = arith.mulf %49, %48 : vector<32x32xf32>
    %51 = arith.truncf %50 : vector<32x32xf32> to vector<32x32xbf16>
    %c1_23 = arith.constant 1 : index
    %c0_24 = arith.constant 0 : index
    %c0_25 = arith.constant 0 : index
    %52 = vector.load %arg4[%c1_23, %c0_24, %c0_25] : memref<2x32x128xbf16, #tpu.memory_space<vmem>>, vector<1x32x16xbf16>
    %53 = vector.shape_cast %52 : vector<1x32x16xbf16> to vector<32x16xbf16>
    %cst_26 = arith.constant dense<0.000000e+00> : vector<32x16xf32>
    %54 = tpu.matmul %51, %53, %cst_26 {dimension_numbers = #tpu.dot_dimension_numbers<[1], [0], [0], [1], [0, 0, 1, 1], [], []>} : vector<32x32xbf16>, vector<32x16xbf16>, vector<32x16xf32> -> vector<32x16xf32>
    %cst_27 = arith.constant dense<0.000000e+00> : vector<32xf32>
    %55 = vector.multi_reduction <add>, %54, %cst_27 [1] : vector<32x16xf32> to vector<32xf32>
    %56 = vector.shape_cast %55 : vector<32xf32> to vector<32x1xf32>
    %cst_28 = arith.constant 6.250000e-02 : f32
    %57 = vector.broadcast %cst_28 : f32 to vector<32x1xf32>
    %58 = arith.mulf %56, %57 : vector<32x1xf32>
    %59 = arith.mulf %54, %54 : vector<32x16xf32>
    %cst_29 = arith.constant dense<0.000000e+00> : vector<32xf32>
    %60 = vector.multi_reduction <add>, %59, %cst_29 [1] : vector<32x16xf32> to vector<32xf32>
    %61 = vector.shape_cast %60 : vector<32xf32> to vector<32x1xf32>
    %cst_30 = arith.constant 6.250000e-02 : f32
    %62 = vector.broadcast %cst_30 : f32 to vector<32x1xf32>
    %63 = arith.mulf %61, %62 : vector<32x1xf32>
    %64 = arith.mulf %58, %58 : vector<32x1xf32>
    %65 = arith.subf %63, %64 : vector<32x1xf32>
    %cst_31 = arith.constant 0.000000e+00 : f32
    %66 = vector.broadcast %cst_31 : f32 to vector<32x1xf32>
    %67 = arith.maximumf %65, %66 : vector<32x1xf32>
    %68 = vector.broadcast %58 : vector<32x1xf32> to vector<32x16xf32>
    %69 = arith.subf %54, %68 : vector<32x16xf32>
    %cst_32 = arith.constant 9.99999974E-6 : f32
    %70 = vector.broadcast %cst_32 : f32 to vector<32x1xf32>
    %71 = arith.addf %67, %70 : vector<32x1xf32>
    %72 = math.rsqrt %71 : vector<32x1xf32>
    %73 = vector.broadcast %72 : vector<32x1xf32> to vector<32x16xf32>
    %74 = arith.mulf %69, %73 : vector<32x16xf32>
    %c4 = arith.constant 4 : index
    %c0_33 = arith.constant 0 : index
    %75 = vector.load %arg6[%c4, %c0_33] : memref<7x256xf32, #tpu.memory_space<vmem>>, vector<1x16xf32>
    %c5 = arith.constant 5 : index
    %c0_34 = arith.constant 0 : index
    %76 = vector.load %arg6[%c5, %c0_34] : memref<7x256xf32, #tpu.memory_space<vmem>>, vector<1x16xf32>
    %77 = vector.broadcast %75 : vector<1x16xf32> to vector<32x16xf32>
    %78 = arith.mulf %74, %77 : vector<32x16xf32>
    %79 = vector.broadcast %76 : vector<1x16xf32> to vector<32x16xf32>
    %80 = arith.addf %78, %79 : vector<32x16xf32>
    %cst_35 = arith.constant 0.000000e+00 : f32
    %81 = vector.broadcast %cst_35 : f32 to vector<32x16xf32>
    %82 = arith.maximumf %80, %81 : vector<32x16xf32>
    %83 = arith.truncf %82 : vector<32x16xf32> to vector<32x16xbf16>
    %c0_36 = arith.constant 0 : index
    %c0_37 = arith.constant 0 : index
    %84 = vector.load %arg5[%c0_36, %c0_37] : memref<16x128xbf16, #tpu.memory_space<vmem>>, vector<16x128xbf16>
    %cst_38 = arith.constant dense<0.000000e+00> : vector<32x128xf32>
    %85 = tpu.matmul %83, %84, %cst_38 {dimension_numbers = #tpu.dot_dimension_numbers<[1], [0], [0], [1], [0, 0, 1, 1], [], []>} : vector<32x16xbf16>, vector<16x128xbf16>, vector<32x128xf32> -> vector<32x128xf32>
    %c6 = arith.constant 6 : index
    %c0_39 = arith.constant 0 : index
    %86 = vector.load %arg6[%c6, %c0_39] : memref<7x256xf32, #tpu.memory_space<vmem>>, vector<1x128xf32>
    %87 = vector.broadcast %86 : vector<1x128xf32> to vector<32x128xf32>
    %88 = arith.addf %85, %87 : vector<32x128xf32>
    %c0_40 = arith.constant 0 : index
    %c0_41 = arith.constant 0 : index
    %89 = vector.load %arg7[%c0_40, %c0_41] : memref<32x128xf32, #tpu.memory_space<vmem>>, vector<32x128xf32>
    tpu.vector_store %arg7[%c0_40, %c0_41], %88 {strides = array<i32>} : memref<32x128xf32, #tpu.memory_space<vmem>>, vector<32x128xf32>,
    return
  }
  func.func @transform_0(%arg0: i32) -> (i32, i32) {
    %c0_i32 = arith.constant 0 : i32
    %c0_i32_0 = arith.constant 0 : i32
    return %arg0, %c0_i32 : i32, i32
  }
  func.func @transform_1(%arg0: i32) -> (i32, i32) {
    %c0_i32 = arith.constant 0 : i32
    %c0_i32_0 = arith.constant 0 : i32
    %c0_i32_1 = arith.constant 0 : i32
    return %c0_i32, %c0_i32_0 : i32, i32
  }
  func.func @transform_2(%arg0: i32) -> (i32, i32) {
    %c0_i32 = arith.constant 0 : i32
    %c0_i32_0 = arith.constant 0 : i32
    %c0_i32_1 = arith.constant 0 : i32
    return %c0_i32, %c0_i32_0 : i32, i32
  }
  func.func @transform_3(%arg0: i32) -> (i32, i32, i32) {
    %c0_i32 = arith.constant 0 : i32
    %c0_i32_0 = arith.constant 0 : i32
    %c0_i32_1 = arith.constant 0 : i32
    %c0_i32_2 = arith.constant 0 : i32
    return %c0_i32, %c0_i32_0, %c0_i32_1 : i32, i32, i32
  }
  func.func @transform_4(%arg0: i32) -> (i32, i32) {
    %c0_i32 = arith.constant 0 : i32
    %c0_i32_0 = arith.constant 0 : i32
    %c0_i32_1 = arith.constant 0 : i32
    return %c0_i32, %c0_i32_0 : i32, i32
  }
  func.func @transform_5(%arg0: i32) -> (i32, i32) {
    %c0_i32 = arith.constant 0 : i32
    %c0_i32_0 = arith.constant 0 : i32
    %c0_i32_1 = arith.constant 0 : i32
    return %c0_i32, %c0_i32_0 : i32, i32
  }
  func.func @transform_6(%arg0: i32) -> (i32, i32) {
    %c0_i32 = arith.constant 0 : i32
    %c0_i32_0 = arith.constant 0 : i32
    return %arg0, %c0_i32 : i32, i32
  }
}

</mosaic_0001>

<llo_original>
// kernel: tpu_custom_call.1
$region0: #{tpu_custom_call.1}
  #allocation0 [shape = 'u32[]', space=smem, size = 0x4, offset = 0x4, fixed_abs, tag = 'smem constant byte address 0x4 - core index']
  #allocation1 [shape = 'u32[144,128]{1,0:T(1,128)}', space=vmem, size = 0x12000, scoped, tag = 'internal scratch']
  %s0 = inlined_call_operand.hbm [shape: f32[32,32], index: 0, kind: input, shape index: {}]
  %s1 = inlined_call_operand.hbm [shape: bf16[32,64], index: 1, kind: input, shape index: {}]
  %s2 = inlined_call_operand.hbm [shape: bf16[64,256], index: 2, kind: input, shape index: {}]
  %s3 = inlined_call_operand.hbm [shape: bf16[2,32,128], index: 3, kind: input, shape index: {}]
  %s4 = inlined_call_operand.hbm [shape: bf16[16,128], index: 4, kind: input, shape index: {}]
  %s5 = inlined_call_operand.vmem [shape: f32[7,256], index: 5, kind: input, shape index: {}]
  %s6 = inlined_call_operand.hbm [shape: f32[32,128], index: 6, kind: output, shape index: {}]
  %s7 = sld [smem:[#allocation0]]
  $region54: #{tpu_custom_call.1} parent=0
    _
  %s9 = ssub.s32 1, %s7
  %s10 = scalar_select 0, %s9, %s7
  $region1: #{tpu_custom_call.1} parent=0
    #allocation2 [shape = 'u8[16384]{0}', space=vmem, size = 0x4000, scoped, tag = 'input window, operand 0, single buffered']
    #allocation3 [shape = 's32[1]{0}', space=sflag, size = 0x4, scoped, tag = 'scoped memory for tpu_custom_call.1']
    #allocation4 [shape = 's32[1]{0}', space=sflag, size = 0x4, scoped, tag = 'scoped memory for tpu_custom_call.1']
    #allocation5 [shape = 'u8[8192]{0}', space=vmem, size = 0x2000, scoped, tag = 'input window, operand 1, single buffered']
    #allocation6 [shape = 's32[1]{0}', space=sflag, size = 0x4, scoped, tag = 'scoped memory for tpu_custom_call.1']
    #allocation7 [shape = 'u8[32768]{0}', space=vmem, size = 0x8000, scoped, tag = 'input window, operand 2, single buffered']
    #allocation8 [shape = 'u8[16384]{0}', space=vmem, size = 0x4000, scoped, tag = 'input window, operand 3, single buffered']
    #allocation9 [shape = 's32[1]{0}', space=sflag, size = 0x4, scoped, tag = 'scoped memory for tpu_custom_call.1']
    #allocation10 [shape = 'u8[4096]{0}', space=vmem, size = 0x1000, scoped, tag = 'input window, operand 4, single buffered']
    #allocation11 [shape = 'u8[16384]{0}', space=vmem, size = 0x4000, scoped, tag = 'output window, operand 0, single buffered']
    %11 = vsyncpa [#allocation3], 0
    %12 = vsyncpa [#allocation6], 0
    %13 = vsyncpa [#allocation9], 0
    %14 = vsyncpa [#allocation4], 0
    // Predicated region
    $region2: #{tpu_custom_call.1} parent=1 // pred_check
      _
    $region3: #{tpu_custom_call.1} parent=1 // pred_check_branch
      %16 = sbr.rel (0) target = $region5
    $region4: #{tpu_custom_call.1} parent=1 // pred_region
      %s18 = ssub.s32 512, 512
      %19 = vsyncadd [#allocation3], %s18
      %s20 = sshll.u32 [#allocation2], 4
      %s21 = int_to_ptr.vmem [resolvable:$true] %s20
      %26 = dma.hbm_to_vmem [thread:$0]  %s0, 512, %s21, [#allocation3], 128, 128, 8
    $region5: #{tpu_custom_call.1} parent=1 // pred_fallthru
      _
    // Predicated region
    $region6: #{tpu_custom_call.1} parent=1 // pred_check
      _
    $region7: #{tpu_custom_call.1} parent=1 // pred_check_branch
      %28 = sbr.rel (0) target = $region9
    $region8: #{tpu_custom_call.1} parent=1 // pred_region
      %s30 = ssub.s32 256, 256
      %31 = vsyncadd [#allocation6], %s30
      %s32 = sshll.u32 [#allocation5], 4
      %s33 = int_to_ptr.vmem [resolvable:$true] %s32
      %38 = dma.hbm_to_vmem [thread:$0]  %s1, 256, %s33, [#allocation6], 64, 64, 4
    $region9: #{tpu_custom_call.1} parent=1 // pred_fallthru
      _
    // Predicated region
    $region10: #{tpu_custom_call.1} parent=1 // pred_check
      _
    $region11: #{tpu_custom_call.1} parent=1 // pred_check_branch
      %40 = sbr.rel (0) target = $region13
    $region12: #{tpu_custom_call.1} parent=1 // pred_region
      %s42 = ssub.s32 1024, 1024
      %43 = vsyncadd [#allocation6], %s42
      %s44 = sshll.u32 [#allocation7], 4
      %s45 = int_to_ptr.vmem [resolvable:$true] %s44
      %50 = dma.hbm_to_vmem [thread:$0]  %s2, 1024, %s45, [#allocation6], 128, 128, 8
    $region13: #{tpu_custom_call.1} parent=1 // pred_fallthru
      _
    // Predicated region
    $region14: #{tpu_custom_call.1} parent=1 // pred_check
      _
    $region15: #{tpu_custom_call.1} parent=1 // pred_check_branch
      %52 = sbr.rel (0) target = $region17
    $region16: #{tpu_custom_call.1} parent=1 // pred_region
      %s54 = ssub.s32 512, 512
      %55 = vsyncadd [#allocation9], %s54
      %s56 = sshll.u32 [#allocation8], 4
      %s57 = int_to_ptr.vmem [resolvable:$true] %s56
      %62 = dma.hbm_to_vmem [thread:$0]  %s3, 512, %s57, [#allocation9], 64, 64, 4
    $region17: #{tpu_custom_call.1} parent=1 // pred_fallthru
      _
    // Predicated region
    $region18: #{tpu_custom_call.1} parent=1 // pred_check
      _
    $region19: #{tpu_custom_call.1} parent=1 // pred_check_branch
      %64 = sbr.rel (0) target = $region21
    $region20: #{tpu_custom_call.1} parent=1 // pred_region
      %s66 = ssub.s32 128, 128
      %67 = vsyncadd [#allocation9], %s66
      %s68 = sshll.u32 [#allocation10], 4
      %s69 = int_to_ptr.vmem [resolvable:$true] %s68
      %74 = dma.hbm_to_vmem [thread:$0]  %s4, 128, %s69, [#allocation9], 64, 64, 4
    $region21: #{tpu_custom_call.1} parent=1 // pred_fallthru
      _
    // Predicated region
    $region22: #{tpu_custom_call.1} parent=1 // pred_check
      _
    $region23: #{tpu_custom_call.1} parent=1 // pred_check_branch
      %76 = sbr.rel (0) target = $region25
    $region24: #{tpu_custom_call.1} parent=1 // pred_region
      _
    $region25: #{tpu_custom_call.1} parent=1 // pred_fallthru
      _
    // Predicated region
    $region26: #{tpu_custom_call.1} parent=1 // pred_check
      _
    $region27: #{tpu_custom_call.1} parent=1 // pred_check_branch
      %78 = sbr.rel (0) target = $region29
    $region28: #{tpu_custom_call.1} parent=1 // pred_region
      %79 = dma.done [#allocation3], 512
    $region29: #{tpu_custom_call.1} parent=1 // pred_fallthru
      _
    // Predicated region
    $region30: #{tpu_custom_call.1} parent=1 // pred_check
      _
    $region31: #{tpu_custom_call.1} parent=1 // pred_check_branch
      %81 = sbr.rel (0) target = $region33
    $region32: #{tpu_custom_call.1} parent=1 // pred_region
      %82 = dma.done [#allocation6], 256
    $region33: #{tpu_custom_call.1} parent=1 // pred_fallthru
      _
    // Predicated region
    $region34: #{tpu_custom_call.1} parent=1 // pred_check
      _
    $region35: #{tpu_custom_call.1} parent=1 // pred_check_branch
      %84 = sbr.rel (0) target = $region37
    $region36: #{tpu_custom_call.1} parent=1 // pred_region
      %85 = dma.done [#allocation6], 1024
    $region37: #{tpu_custom_call.1} parent=1 // pred_fallthru
      _
    // Predicated region
    $region38: #{tpu_custom_call.1} parent=1 // pred_check
      _
    $region39: #{tpu_custom_call.1} parent=1 // pred_check_branch
      %87 = sbr.rel (0) target = $region41
    $region40: #{tpu_custom_call.1} parent=1 // pred_region
      %88 = dma.done [#allocation9], 512
    $region41: #{tpu_custom_call.1} parent=1 // pred_fallthru
      _
    // Predicated region
    $region42: #{tpu_custom_call.1} parent=1 // pred_check
      _
    $region43: #{tpu_custom_call.1} parent=1 // pred_check_branch
      %90 = sbr.rel (0) target = $region45
    $region44: #{tpu_custom_call.1} parent=1 // pred_region
      %91 = dma.done [#allocation9], 128
    $region45: #{tpu_custom_call.1} parent=1 // pred_fallthru
      _
    %v93 = vld [vmem:[#allocation2] sm:$0xff]
    %v94 = vld [vmem:[#allocation2 + $0x8] sm:$0xff]
    %v95 = vld [vmem:[#allocation2 + $0x10] sm:$0xff]
    %v96 = vld [vmem:[#allocation2 + $0x18] sm:$0xff]
    %v97 = vpack.c.bf16 %v94, %v93
    %v98 = vpack.c.bf16 %v96, %v95
    %v99 = vld [vmem:[#allocation5] sm:$0xf]
    %v100 = vld [vmem:[#allocation5 + $0x4] sm:$0xf]
    %v101 = vld [vmem:[#allocation5 + $0x8] sm:$0xf]
    %v102 = vld [vmem:[#allocation5 + $0xc] sm:$0xf]
    %v103 = vld [vmem:[%s5] ss:$0 sm:$0xff]
    %v108 = vunpack.c.l.b16 %v99
    %v109 = vunpack.c.l.b16 %v100
    %v110 = vunpack.c.l.b16 %v101
    %v111 = vunpack.c.l.b16 %v102
    %v112 = vpack.c.b16 %v109, %v108
    %v113 = vpack.c.b16 %v111, %v110
    %vm116 = vcmask 261120
    %v118 = vsel %vm116, %v97, 0
    %v121 = vsel %vm116, %v98, 0
    %123 = vmatprep.subr.bf16.mxu0 0
    %124 = vmatpush1.bf16.msra.mxu0 %v112
    %125 = vmatprep.subr.bf16.mxu0 0
    %126 = vmatpush1.bf16.msra.mxu0 %v113
    %127 = vmatprep.subr.bf16.mxu0 0
    %128 = vmatpush1.bf16.msra.mxu0 0
    %129 = vmatprep.subr.bf16.mxu0 0
    %130 = vmatpush1.bf16.msra.mxu0 0
    %131 = vmatprep.subr.bf16.mxu0 0
    %132 = vmatpush1.bf16.msra.mxu0 0
    %133 = vmatprep.subr.bf16.mxu0 0
    %134 = vmatpush1.bf16.msra.mxu0 0
    %135 = vmatprep.subr.bf16.mxu0 0
    %136 = vmatpush1.bf16.msra.mxu0 0
    %137 = vmatprep.subr.bf16.mxu0 0
    %138 = vmatpush1.bf16.msra.mxu0 0
    %139 = vmatprep.subr.bf16.mxu0 0
    %140 = vmatpush1.bf16.msra.mxu0 0
    %141 = vmatprep.subr.bf16.mxu0 0
    %142 = vmatpush1.bf16.msra.mxu0 0
    %143 = vmatprep.subr.bf16.mxu0 0
    %144 = vmatpush1.bf16.msra.mxu0 0
    %145 = vmatprep.subr.bf16.mxu0 0
    %146 = vmatpush1.bf16.msra.mxu0 0
    %147 = vmatprep.subr.bf16.mxu0 0
    %148 = vmatpush1.bf16.msra.mxu0 0
    %149 = vmatprep.subr.bf16.mxu0 0
    %150 = vmatpush1.bf16.msra.mxu0 0
    %151 = vmatprep.subr.bf16.mxu0 0
    %152 = vmatpush1.bf16.msra.mxu0 0
    %153 = vmatprep.subr.bf16.mxu0 0
    %154 = vmatpush1.bf16.msra.mxu0 0
    %155 = vmatprep.mubr.bf16.mxu0 0
    %156 = vmatmul.mubr.bf16.gmra.mrb[0].mxu0 %v118
    %v157 = vpop.f32.mrb[0].mxu0
    %v158 = vadd.f32 %v103, %v157
    %v159 = vpop.f32.mrb[0].mxu0
    %v160 = vpop.f32.mrb[0].mxu0
    %v161 = vadd.f32 %v103, %v160
    %v162 = vpop.f32.mrb[0].mxu0
    %163 = vmatprep.mubr.bf16.mxu0 0
    %164 = vmatmul.mubr.bf16.gmra.mrb[0].mxu0 %v121
    %v165 = vpop.f32.mrb[0].mxu0
    %v166 = vadd.f32 %v103, %v165
    %v167 = vpop.f32.mrb[0].mxu0
    %v168 = vpop.f32.mrb[0].mxu0
    %v169 = vadd.f32 %v103, %v168
    %v170 = vpop.f32.mrb[0].mxu0
    %171 = vdwg.mxu0
    %v172 = vmax.f32 %v158, 0.0
    %v173 = vmax.f32 %v161, 0.0
    %v174 = vmax.f32 %v166, 0.0
    %v175 = vmax.f32 %v169, 0.0
    %v176 = vpack.c.bf16 %v173, %v172
    %v177 = vpack.c.bf16 %v175, %v174
    %v178 = vld [vmem:[#allocation7] sm:$0xff]
    %v179 = vld [vmem:[#allocation7 + $0x8] sm:$0xff]
    %v180 = vld [vmem:[#allocation7 + $0x10] sm:$0xff]
    %v181 = vld [vmem:[#allocation7 + $0x18] sm:$0xff]
    %v182 = vld [vmem:[#allocation7 + $0x20] sm:$0xff]
    %v183 = vld [vmem:[#allocation7 + $0x28] sm:$0xff]
    %v184 = vld [vmem:[#allocation7 + $0x30] sm:$0xff]
    %v185 = vld [vmem:[#allocation7 + $0x38] sm:$0xff]
    %s186 = scalar_lea.vmem %s5, 1
    %v187 = vld [vmem:[%s186] ss:$8 sm:$0x3]
    %v189 = vlaneseq
    %v190 = vshrl.u32 %v189, 7
    %v191 = vsub.s32 0, %v190
    %v192 = vrot.slane %v187, %v191
    %v193 = vlaneseq
    %v194 = vshrl.u32 %v193, 7
    %v195 = vsub.s32 1, %v194
    %v196 = vrot.slane %v187, %v195
    %v207 = vunpack.c.l.b16 %v178
    %v208 = vunpack.c.h.b16 %v178
    %v209 = vunpack.c.l.b16 %v179
    %v210 = vunpack.c.h.b16 %v179
    %v211 = vunpack.c.l.b16 %v180
    %v212 = vunpack.c.h.b16 %v180
    %v213 = vunpack.c.l.b16 %v181
    %v214 = vunpack.c.h.b16 %v181
    %v215 = vunpack.c.l.b16 %v182
    %v216 = vunpack.c.h.b16 %v182
    %v217 = vunpack.c.l.b16 %v183
    %v218 = vunpack.c.h.b16 %v183
    %v219 = vunpack.c.l.b16 %v184
    %v220 = vunpack.c.h.b16 %v184
    %v221 = vunpack.c.l.b16 %v185
    %v222 = vunpack.c.h.b16 %v185
    %v223 = vpack.c.b16 %v209, %v207
    %v224 = vpack.c.b16 %v210, %v208
    %v225 = vpack.c.b16 %v213, %v211
    %v226 = vpack.c.b16 %v214, %v212
    %v227 = vpack.c.b16 %v217, %v215
    %v228 = vpack.c.b16 %v218, %v216
    %v229 = vpack.c.b16 %v221, %v219
    %v230 = vpack.c.b16 %v222, %v220
    %vm239 = vcmask 523264
    %v241 = vsel %vm239, %v176, 0
    %v244 = vsel %vm239, %v177, 0
    %246 = vmatprep.subr.bf16.mxu0 %v224
    %247 = vmatpush1.bf16.msra.mxu0 %v223
    %248 = vmatprep.subr.bf16.mxu0 %v226
    %249 = vmatpush1.bf16.msra.mxu0 %v225
    %250 = vmatprep.subr.bf16.mxu0 %v228
    %251 = vmatpush1.bf16.msra.mxu0 %v227
    %252 = vmatprep.subr.bf16.mxu0 %v230
    %253 = vmatpush1.bf16.msra.mxu0 %v229
    %254 = vmatprep.subr.bf16.mxu0 0
    %255 = vmatpush1.bf16.msra.mxu0 0
    %256 = vmatprep.subr.bf16.mxu0 0
    %257 = vmatpush1.bf16.msra.mxu0 0
    %258 = vmatprep.subr.bf16.mxu0 0
    %259 = vmatpush1.bf16.msra.mxu0 0
    %260 = vmatprep.subr.bf16.mxu0 0
    %261 = vmatpush1.bf16.msra.mxu0 0
    %262 = vmatprep.subr.bf16.mxu0 0
    %263 = vmatpush1.bf16.msra.mxu0 0
    %264 = vmatprep.subr.bf16.mxu0 0
    %265 = vmatpush1.bf16.msra.mxu0 0
    %266 = vmatprep.subr.bf16.mxu0 0
    %267 = vmatpush1.bf16.msra.mxu0 0
    %268 = vmatprep.subr.bf16.mxu0 0
    %269 = vmatpush1.bf16.msra.mxu0 0
    %270 = vmatprep.subr.bf16.mxu0 0
    %271 = vmatpush1.bf16.msra.mxu0 0
    %272 = vmatprep.subr.bf16.mxu0 0
    %273 = vmatpush1.bf16.msra.mxu0 0
    %274 = vmatprep.subr.bf16.mxu0 0
    %275 = vmatpush1.bf16.msra.mxu0 0
    %276 = vmatprep.subr.bf16.mxu0 0
    %277 = vmatpush1.bf16.msra.mxu0 0
    %278 = vmatprep.mubr.bf16.mxu0 0
    %279 = vmatmul.mubr.bf16.gmra.mrb[0].mxu0 %v241
    %v280 = vpop.f32.mrb[0].mxu0
    %v281 = vadd.f32 %v192, %v280
    %v282 = vpop.f32.mrb[0].mxu0
    %v283 = vadd.f32 %v196, %v282
    %v284 = vpop.f32.mrb[0].mxu0
    %v285 = vadd.f32 %v192, %v284
    %v286 = vpop.f32.mrb[0].mxu0
    %v287 = vadd.f32 %v196, %v286
    %288 = vmatprep.mubr.bf16.mxu0 0
    %289 = vmatmul.mubr.bf16.gmra.mrb[0].mxu0 %v244
    %v290 = vpop.f32.mrb[0].mxu0
    %v291 = vadd.f32 %v192, %v290
    %v292 = vpop.f32.mrb[0].mxu0
    %v293 = vadd.f32 %v196, %v292
    %v294 = vpop.f32.mrb[0].mxu0
    %v295 = vadd.f32 %v192, %v294
    %v296 = vpop.f32.mrb[0].mxu0
    %v297 = vadd.f32 %v196, %v296
    %298 = vdwg.mxu0
    %v299 = vmul.f32 %v281, %v93
    %v300 = vmul.f32 %v285, %v94
    %v301 = vmul.f32 %v291, %v95
    %v302 = vmul.f32 %v295, %v96
    %v303 = vpack.c.bf16 %v300, %v299
    %v304 = vpack.c.bf16 %v302, %v301
    %v305 = vld [vmem:[#allocation8] sm:$0xf]
    %v306 = vld [vmem:[#allocation8 + $0x4] sm:$0xf]
    %v307 = vld [vmem:[#allocation8 + $0x8] sm:$0xf]
    %v308 = vld [vmem:[#allocation8 + $0xc] sm:$0xf]
    %v313 = vunpack.c.l.b16 %v305
    %v314 = vunpack.c.l.b16 %v306
    %v315 = vunpack.c.l.b16 %v307
    %v316 = vunpack.c.l.b16 %v308
    %v317 = vpack.c.b16 %v314, %v313
    %v318 = vpack.c.b16 %v316, %v315
    %v322 = vsel %vm116, %v303, 0
    %v325 = vsel %vm116, %v304, 0
    %327 = vmatprep.subr.bf16.mxu0 0
    %328 = vmatpush1.bf16.msra.mxu0 %v317
    %329 = vmatprep.subr.bf16.mxu0 0
    %330 = vmatpush1.bf16.msra.mxu0 %v318
    %331 = vmatprep.subr.bf16.mxu0 0
    %332 = vmatpush1.bf16.msra.mxu0 0
    %333 = vmatprep.subr.bf16.mxu0 0
    %334 = vmatpush1.bf16.msra.mxu0 0
    %335 = vmatprep.subr.bf16.mxu0 0
    %336 = vmatpush1.bf16.msra.mxu0 0
    %337 = vmatprep.subr.bf16.mxu0 0
    %338 = vmatpush1.bf16.msra.mxu0 0
    %339 = vmatprep.subr.bf16.mxu0 0
    %340 = vmatpush1.bf16.msra.mxu0 0
    %341 = vmatprep.subr.bf16.mxu0 0
    %342 = vmatpush1.bf16.msra.mxu0 0
    %343 = vmatprep.subr.bf16.mxu0 0
    %344 = vmatpush1.bf16.msra.mxu0 0
    %345 = vmatprep.subr.bf16.mxu0 0
    %346 = vmatpush1.bf16.msra.mxu0 0
    %347 = vmatprep.subr.bf16.mxu0 0
    %348 = vmatpush1.bf16.msra.mxu0 0
    %349 = vmatprep.subr.bf16.mxu0 0
    %350 = vmatpush1.bf16.msra.mxu0 0
    %351 = vmatprep.subr.bf16.mxu0 0
    %352 = vmatpush1.bf16.msra.mxu0 0
    %353 = vmatprep.subr.bf16.mxu0 0
    %354 = vmatpush1.bf16.msra.mxu0 0
    %355 = vmatprep.subr.bf16.mxu0 0
    %356 = vmatpush1.bf16.msra.mxu0 0
    %357 = vmatprep.subr.bf16.mxu0 0
    %358 = vmatpush1.bf16.msra.mxu0 0
    %359 = vmatprep.mubr.bf16.mxu0 0
    %360 = vmatmul.mubr.bf16.gmra.mrb[0].mxu0 %v322
    %v361 = vpop.f32.mrb[0].mxu0
    %v362 = vadd.f32 0.0, %v361
    %v363 = vpop.f32.mrb[0].mxu0
    %v364 = vpop.f32.mrb[0].mxu0
    %v365 = vadd.f32 0.0, %v364
    %v366 = vpop.f32.mrb[0].mxu0
    %367 = vmatprep.mubr.bf16.mxu0 0
    %368 = vmatmul.mubr.bf16.gmra.mrb[0].mxu0 %v325
    %v369 = vpop.f32.mrb[0].mxu0
    %v370 = vadd.f32 0.0, %v369
    %v371 = vpop.f32.mrb[0].mxu0
    %v372 = vpop.f32.mrb[0].mxu0
    %v373 = vadd.f32 0.0, %v372
    %v374 = vpop.f32.mrb[0].mxu0
    %375 = vdwg.mxu0
    %v376 = vsel %vm116, %v362, 0.0
    %377 = vadd.xlane.f32.xlu0 %v376
    %v378 = vpop.xlane.xlu0 %377
    %v379 = vsel %vm116, %v365, 0.0
    %380 = vadd.xlane.f32.xlu0 %v379
    %v381 = vpop.xlane.xlu0 %380
    %v382 = vsel %vm116, %v370, 0.0
    %383 = vadd.xlane.f32.xlu0 %v382
    %v384 = vpop.xlane.xlu0 %383
    %v385 = vsel %vm116, %v373, 0.0
    %386 = vadd.xlane.f32.xlu0 %v385
    %v387 = vpop.xlane.xlu0 %386
    %v388 = vmul.f32 %v378, 0.03125
    %v389 = vmul.f32 %v381, 0.03125
    %v390 = vmul.f32 %v384, 0.03125
    %v391 = vmul.f32 %v387, 0.03125
    %v392 = vmul.f32 %v362, %v362
    %v393 = vmul.f32 %v365, %v365
    %v394 = vmul.f32 %v370, %v370
    %v395 = vmul.f32 %v373, %v373
    %v396 = vsel %vm116, %v392, 0.0
    %397 = vadd.xlane.f32.xlu0 %v396
    %v398 = vpop.xlane.xlu0 %397
    %v399 = vsel %vm116, %v393, 0.0
    %400 = vadd.xlane.f32.xlu0 %v399
    %v401 = vpop.xlane.xlu0 %400
    %v402 = vsel %vm116, %v394, 0.0
    %403 = vadd.xlane.f32.xlu0 %v402
    %v404 = vpop.xlane.xlu0 %403
    %v405 = vsel %vm116, %v395, 0.0
    %406 = vadd.xlane.f32.xlu0 %v405
    %v407 = vpop.xlane.xlu0 %406
    %v408 = vmul.f32 %v398, 0.03125
    %v409 = vmul.f32 %v401, 0.03125
    %v410 = vmul.f32 %v404, 0.03125
    %v411 = vmul.f32 %v407, 0.03125
    %v412 = vmul.f32 %v388, %v388
    %v413 = vmul.f32 %v389, %v389
    %v414 = vmul.f32 %v390, %v390
    %v415 = vmul.f32 %v391, %v391
    %v416 = vsub.f32 %v408, %v412
    %v417 = vsub.f32 %v409, %v413
    %v418 = vsub.f32 %v410, %v414
    %v419 = vsub.f32 %v411, %v415
    %v420 = vmax.f32 %v416, 0.0
    %v421 = vmax.f32 %v417, 0.0
    %v422 = vmax.f32 %v418, 0.0
    %v423 = vmax.f32 %v419, 0.0
    %v424 = vsub.f32 %v362, %v388
    %v425 = vsub.f32 %v365, %v389
    %v426 = vsub.f32 %v370, %v390
    %v427 = vsub.f32 %v373, %v391
    %v428 = vadd.f32 %v420, 1e-05
    %v429 = vadd.f32 %v421, 1e-05
    %v430 = vadd.f32 %v422, 1e-05
    %v431 = vadd.f32 %v423, 1e-05
    %v432 = vrsqrt.pop %v428
    %v433 = vrsqrt.pop %v429
    %v434 = vrsqrt.pop %v430
    %v435 = vrsqrt.pop %v431
    %v436 = vmul.f32 %v424, %v432
    %v437 = vmul.f32 %v425, %v433
    %v438 = vmul.f32 %v426, %v434
    %v439 = vmul.f32 %v427, %v435
    %v440 = vld [vmem:[%s5 + $0x2] ss:$0 sm:$0xff]
    %v441 = vld [vmem:[%s5 + $0x3] ss:$0 sm:$0xff]
    %v442 = vmul.f32 %v436, %v440
    %v443 = vmul.f32 %v437, %v440
    %v444 = vmul.f32 %v438, %v440
    %v445 = vmul.f32 %v439, %v440
    %v446 = vadd.f32 %v442, %v441
    %v447 = vadd.f32 %v443, %v441
    %v448 = vadd.f32 %v444, %v441
    %v449 = vadd.f32 %v445, %v441
    %v450 = vmax.f32 %v446, 0.0
    %v451 = vmax.f32 %v447, 0.0
    %v452 = vmax.f32 %v448, 0.0
    %v453 = vmax.f32 %v449, 0.0
    %v454 = vmul.f32 %v283, %v450
    %v455 = vmul.f32 %v287, %v451
    %v456 = vmul.f32 %v293, %v452
    %v457 = vmul.f32 %v297, %v453
    %v458 = vpack.c.bf16 %v455, %v454
    %v459 = vpack.c.bf16 %v457, %v456
    %s460 = scalar_lea.vmem [#allocation8], 16
    %v461 = vld [vmem:[%s460] sm:$0xf]
    %v462 = vld [vmem:[%s460 + $0x4] sm:$0xf]
    %v463 = vld [vmem:[%s460 + $0x8] sm:$0xf]
    %v464 = vld [vmem:[%s460 + $0xc] sm:$0xf]
    %v469 = vunpack.c.l.b16 %v461
    %v470 = vunpack.c.l.b16 %v462
    %v471 = vunpack.c.l.b16 %v463
    %v472 = vunpack.c.l.b16 %v464
    %v473 = vpack.c.b16 %v470, %v469
    %v474 = vpack.c.b16 %v472, %v471
    %v478 = vsel %vm116, %v458, 0
    %v481 = vsel %vm116, %v459, 0
    %483 = vmatprep.subr.bf16.mxu0 0
    %484 = vmatpush1.bf16.msra.mxu0 %v473
    %485 = vmatprep.subr.bf16.mxu0 0
    %486 = vmatpush1.bf16.msra.mxu0 %v474
    %487 = vmatprep.subr.bf16.mxu0 0
    %488 = vmatpush1.bf16.msra.mxu0 0
    %489 = vmatprep.subr.bf16.mxu0 0
    %490 = vmatpush1.bf16.msra.mxu0 0
    %491 = vmatprep.subr.bf16.mxu0 0
    %492 = vmatpush1.bf16.msra.mxu0 0
    %493 = vmatprep.subr.bf16.mxu0 0
    %494 = vmatpush1.bf16.msra.mxu0 0
    %495 = vmatprep.subr.bf16.mxu0 0
    %496 = vmatpush1.bf16.msra.mxu0 0
    %497 = vmatprep.subr.bf16.mxu0 0
    %498 = vmatpush1.bf16.msra.mxu0 0
    %499 = vmatprep.subr.bf16.mxu0 0
    %500 = vmatpush1.bf16.msra.mxu0 0
    %501 = vmatprep.subr.bf16.mxu0 0
    %502 = vmatpush1.bf16.msra.mxu0 0
    %503 = vmatprep.subr.bf16.mxu0 0
    %504 = vmatpush1.bf16.msra.mxu0 0
    %505 = vmatprep.subr.bf16.mxu0 0
    %506 = vmatpush1.bf16.msra.mxu0 0
    %507 = vmatprep.subr.bf16.mxu0 0
    %508 = vmatpush1.bf16.msra.mxu0 0
    %509 = vmatprep.subr.bf16.mxu0 0
    %510 = vmatpush1.bf16.msra.mxu0 0
    %511 = vmatprep.subr.bf16.mxu0 0
    %512 = vmatpush1.bf16.msra.mxu0 0
    %513 = vmatprep.subr.bf16.mxu0 0
    %514 = vmatpush1.bf16.msra.mxu0 0
    %515 = vmatprep.mubr.bf16.mxu0 0
    %516 = vmatmul.mubr.bf16.gmra.mrb[0].mxu0 %v478
    %v517 = vpop.f32.mrb[0].mxu0
    %v518 = vadd.f32 0.0, %v517
    %v519 = vpop.f32.mrb[0].mxu0
    %v520 = vpop.f32.mrb[0].mxu0
    %v521 = vadd.f32 0.0, %v520
    %v522 = vpop.f32.mrb[0].mxu0
    %523 = vmatprep.mubr.bf16.mxu0 0
    %524 = vmatmul.mubr.bf16.gmra.mrb[0].mxu0 %v481
    %v525 = vpop.f32.mrb[0].mxu0
    %v526 = vadd.f32 0.0, %v525
    %v527 = vpop.f32.mrb[0].mxu0
    %v528 = vpop.f32.mrb[0].mxu0
    %v529 = vadd.f32 0.0, %v528
    %v530 = vpop.f32.mrb[0].mxu0
    %531 = vdwg.mxu0
    %vm532 = vcmask 130048
    %v533 = vsel %vm532, %v518, 0.0
    %534 = vadd.xlane.f32.xlu0 %v533
    %v535 = vpop.xlane.xlu0 %534
    %v536 = vsel %vm532, %v521, 0.0
    %537 = vadd.xlane.f32.xlu0 %v536
    %v538 = vpop.xlane.xlu0 %537
    %v539 = vsel %vm532, %v526, 0.0
    %540 = vadd.xlane.f32.xlu0 %v539
    %v541 = vpop.xlane.xlu0 %540
    %v542 = vsel %vm532, %v529, 0.0
    %543 = vadd.xlane.f32.xlu0 %v542
    %v544 = vpop.xlane.xlu0 %543
    %v545 = vmul.f32 %v535, 0.0625
    %v546 = vmul.f32 %v538, 0.0625
    %v547 = vmul.f32 %v541, 0.0625
    %v548 = vmul.f32 %v544, 0.0625
    %v549 = vmul.f32 %v518, %v518
    %v550 = vmul.f32 %v521, %v521
    %v551 = vmul.f32 %v526, %v526
    %v552 = vmul.f32 %v529, %v529
    %v553 = vsel %vm532, %v549, 0.0
    %554 = vadd.xlane.f32.xlu0 %v553
    %v555 = vpop.xlane.xlu0 %554
    %v556 = vsel %vm532, %v550, 0.0
    %557 = vadd.xlane.f32.xlu0 %v556
    %v558 = vpop.xlane.xlu0 %557
    %v559 = vsel %vm532, %v551, 0.0
    %560 = vadd.xlane.f32.xlu0 %v559
    %v561 = vpop.xlane.xlu0 %560
    %v562 = vsel %vm532, %v552, 0.0
    %563 = vadd.xlane.f32.xlu0 %v562
    %v564 = vpop.xlane.xlu0 %563
    %v565 = vmul.f32 %v555, 0.0625
    %v566 = vmul.f32 %v558, 0.0625
    %v567 = vmul.f32 %v561, 0.0625
    %v568 = vmul.f32 %v564, 0.0625
    %v569 = vmul.f32 %v545, %v545
    %v570 = vmul.f32 %v546, %v546
    %v571 = vmul.f32 %v547, %v547
    %v572 = vmul.f32 %v548, %v548
    %v573 = vsub.f32 %v565, %v569
    %v574 = vsub.f32 %v566, %v570
    %v575 = vsub.f32 %v567, %v571
    %v576 = vsub.f32 %v568, %v572
    %v577 = vmax.f32 %v573, 0.0
    %v578 = vmax.f32 %v574, 0.0
    %v579 = vmax.f32 %v575, 0.0
    %v580 = vmax.f32 %v576, 0.0
    %v581 = vsub.f32 %v518, %v545
    %v582 = vsub.f32 %v521, %v546
    %v583 = vsub.f32 %v526, %v547
    %v584 = vsub.f32 %v529, %v548
    %v585 = vadd.f32 %v577, 1e-05
    %v586 = vadd.f32 %v578, 1e-05
    %v587 = vadd.f32 %v579, 1e-05
    %v588 = vadd.f32 %v580, 1e-05
    %v589 = vrsqrt.pop %v585
    %v590 = vrsqrt.pop %v586
    %v591 = vrsqrt.pop %v587
    %v592 = vrsqrt.pop %v588
    %v593 = vmul.f32 %v581, %v589
    %v594 = vmul.f32 %v582, %v590
    %v595 = vmul.f32 %v583, %v591
    %v596 = vmul.f32 %v584, %v592
    %v597 = vld [vmem:[%s5 + $0x4] ss:$0 sm:$0xff]
    %v598 = vld [vmem:[%s5 + $0x5] ss:$0 sm:$0xff]
    %v599 = vmul.f32 %v593, %v597
    %v600 = vmul.f32 %v594, %v597
    %v601 = vmul.f32 %v595, %v597
    %v602 = vmul.f32 %v596, %v597
    %v603 = vadd.f32 %v599, %v598
    %v604 = vadd.f32 %v600, %v598
    %v605 = vadd.f32 %v601, %v598
    %v606 = vadd.f32 %v602, %v598
    %v607 = vmax.f32 %v603, 0.0
    %v608 = vmax.f32 %v604, 0.0
    %v609 = vmax.f32 %v605, 0.0
    %v610 = vmax.f32 %v606, 0.0
    %v611 = vpack.c.bf16 %v608, %v607
    %v612 = vpack.c.bf16 %v610, %v609
    %v613 = vld [vmem:[#allocation10] sm:$0xf]
    %v614 = vld [vmem:[#allocation10 + $0x4] sm:$0xf]
    %v615 = vld [vmem:[%s5 + $0x6] ss:$0 sm:$0xff]
    %v618 = vunpack.c.l.b16 %v613
    %v619 = vunpack.c.l.b16 %v614
    %v620 = vpack.c.b16 %v619, %v618
    %v623 = vsel %vm532, %v611, 0
    %v626 = vsel %vm532, %v612, 0
    %628 = vmatprep.subr.bf16.mxu0 0
    %629 = vmatpush1.bf16.msra.mxu0 %v620
    %630 = vmatprep.subr.bf16.mxu0 0
    %631 = vmatpush1.bf16.msra.mxu0 0
    %632 = vmatprep.subr.bf16.mxu0 0
    %633 = vmatpush1.bf16.msra.mxu0 0
    %634 = vmatprep.subr.bf16.mxu0 0
    %635 = vmatpush1.bf16.msra.mxu0 0
    %636 = vmatprep.subr.bf16.mxu0 0
    %637 = vmatpush1.bf16.msra.mxu0 0
    %638 = vmatprep.subr.bf16.mxu0 0
    %639 = vmatpush1.bf16.msra.mxu0 0
    %640 = vmatprep.subr.bf16.mxu0 0
    %641 = vmatpush1.bf16.msra.mxu0 0
    %642 = vmatprep.subr.bf16.mxu0 0
    %643 = vmatpush1.bf16.msra.mxu0 0
    %644 = vmatprep.subr.bf16.mxu0 0
    %645 = vmatpush1.bf16.msra.mxu0 0
    %646 = vmatprep.subr.bf16.mxu0 0
    %647 = vmatpush1.bf16.msra.mxu0 0
    %648 = vmatprep.subr.bf16.mxu0 0
    %649 = vmatpush1.bf16.msra.mxu0 0
    %650 = vmatprep.subr.bf16.mxu0 0
    %651 = vmatpush1.bf16.msra.mxu0 0
    %652 = vmatprep.subr.bf16.mxu0 0
    %653 = vmatpush1.bf16.msra.mxu0 0
    %654 = vmatprep.subr.bf16.mxu0 0
    %655 = vmatpush1.bf16.msra.mxu0 0
    %656 = vmatprep.subr.bf16.mxu0 0
    %657 = vmatpush1.bf16.msra.mxu0 0
    %658 = vmatprep.subr.bf16.mxu0 0
    %659 = vmatpush1.bf16.msra.mxu0 0
    %660 = vmatprep.mubr.bf16.mxu0 0
    %661 = vmatmul.mubr.bf16.gmra.mrb[0].mxu0 %v623
    %v662 = vpop.f32.mrb[0].mxu0
    %v663 = vadd.f32 %v615, %v662
    %v664 = vpop.f32.mrb[0].mxu0
    %v665 = vpop.f32.mrb[0].mxu0
    %v666 = vadd.f32 %v615, %v665
    %v667 = vpop.f32.mrb[0].mxu0
    %668 = vmatprep.mubr.bf16.mxu0 0
    %669 = vmatmul.mubr.bf16.gmra.mrb[0].mxu0 %v626
    %v670 = vpop.f32.mrb[0].mxu0
    %v671 = vadd.f32 %v615, %v670
    %v672 = vpop.f32.mrb[0].mxu0
    %v673 = vpop.f32.mrb[0].mxu0
    %v674 = vadd.f32 %v615, %v673
    %v675 = vpop.f32.mrb[0].mxu0
    %676 = vdwg.mxu0
    %677 = vst [vmem:[#allocation11] sm:$0xff] %v663
    %678 = vst [vmem:[#allocation11 + $0x8] sm:$0xff] %v666
    %679 = vst [vmem:[#allocation11 + $0x10] sm:$0xff] %v671
    %680 = vst [vmem:[#allocation11 + $0x18] sm:$0xff] %v674
    // Predicated region
    $region46: #{tpu_custom_call.1} parent=1 // pred_check
      _
    $region47: #{tpu_custom_call.1} parent=1 // pred_check_branch
      %682 = sbr.rel (0) target = $region49
    $region48: #{tpu_custom_call.1} parent=1 // pred_region
      %s684 = ssub.s32 512, 512
      %685 = vsyncadd [#allocation4], %s684
      %s686 = sshll.u32 [#allocation11], 4
      %s687 = int_to_ptr.vmem [resolvable:$true] %s686
      %692 = dma.vmem_to_hbm [thread:$0]  %s687, 512, %s6, [#allocation4], 128, 128, 8
    $region49: #{tpu_custom_call.1} parent=1 // pred_fallthru
      _
    // Predicated region
    $region50: #{tpu_custom_call.1} parent=1 // pred_check
      _
    $region51: #{tpu_custom_call.1} parent=1 // pred_check_branch
      %694 = sbr.rel (0) target = $region53
    $region52: #{tpu_custom_call.1} parent=1 // pred_region
      %695 = dma.done [#allocation4], 512
    $region53: #{tpu_custom_call.1} parent=1 // pred_fallthru
      _
    %696 = vsyncpa [#allocation3], 1
    %697 = vsyncpa [#allocation6], 1
    %698 = vsyncpa [#allocation9], 1
    %699 = vsyncpa [#allocation4], 1

// kernel: tpu_custom_call.1
$region0: #{tpu_custom_call.1}
  #allocation0 [shape = 'u32[]', space=smem, size = 0x4, offset = 0x4, fixed_abs, tag = 'smem constant byte address 0x4 - core index']
  #allocation1 [shape = 'u32[144,128]{1,0:T(1,128)}', space=vmem, size = 0x12000, scoped, tag = 'internal scratch']
  %s0 = inlined_call_operand.hbm [shape: f32[32,32], index: 0, kind: input, shape index: {}]
  %s1 = inlined_call_operand.hbm [shape: bf16[32,64], index: 1, kind: input, shape index: {}]
  %s2 = inlined_call_operand.hbm [shape: bf16[64,256], index: 2, kind: input, shape index: {}]
  %s3 = inlined_call_operand.hbm [shape: bf16[2,32,128], index: 3, kind: input, shape index: {}]
  %s4 = inlined_call_operand.hbm [shape: bf16[16,128], index: 4, kind: input, shape index: {}]
  %s5 = inlined_call_operand.vmem [shape: f32[7,256], index: 5, kind: input, shape index: {}]
  %s6 = inlined_call_operand.hbm [shape: f32[32,128], index: 6, kind: output, shape index: {}]
  %s7 = sld [smem:[#allocation0]]
  $region54: #{tpu_custom_call.1} parent=0
    _
  %s9 = ssub.s32 1, %s7
  %s10 = scalar_select 0, %s9, %s7
  $region1: #{tpu_custom_call.1} parent=0
    #allocation2 [shape = 'u8[16384]{0}', space=vmem, size = 0x4000, scoped, tag = 'input window, operand 0, single buffered']
    #allocation3 [shape = 's32[1]{0}', space=sflag, size = 0x4, scoped, tag = 'scoped memory for tpu_custom_call.1']
    #allocation4 [shape = 's32[1]{0}', space=sflag, size = 0x4, scoped, tag = 'scoped memory for tpu_custom_call.1']
    #allocation5 [shape = 'u8[8192]{0}', space=vmem, size = 0x2000, scoped, tag = 'input window, operand 1, single buffered']
    #allocation6 [shape = 's32[1]{0}', space=sflag, size = 0x4, scoped, tag = 'scoped memory for tpu_custom_call.1']
    #allocation7 [shape = 'u8[32768]{0}', space=vmem, size = 0x8000, scoped, tag = 'input window, operand 2, single buffered']
    #allocation8 [shape = 'u8[16384]{0}', space=vmem, size = 0x4000, scoped, tag = 'input window, operand 3, single buffered']
    #allocation9 [shape = 's32[1]{0}', space=sflag, size = 0x4, scoped, tag = 'scoped memory for tpu_custom_call.1']
    #allocation10 [shape = 'u8[4096]{0}', space=vmem, size = 0x1000, scoped, tag = 'input window, operand 4, single buffered']
    #allocation11 [shape = 'u8[16384]{0}', space=vmem, size = 0x4000, scoped, tag = 'output window, operand 0, single buffered']
    %11 = vsyncpa [#allocation3], 0
    %12 = vsyncpa [#allocation6], 0
    %13 = vsyncpa [#allocation9], 0
    %14 = vsyncpa [#allocation4], 0
    // Predicated region
    $region2: #{tpu_custom_call.1} parent=1 // pred_check
      _
    $region3: #{tpu_custom_call.1} parent=1 // pred_check_branch
      %16 = sbr.rel (0) target = $region5
    $region4: #{tpu_custom_call.1} parent=1 // pred_region
      %s18 = ssub.s32 512, 512
      %19 = vsyncadd [#allocation3], %s18
      %s20 = sshll.u32 [#allocation2], 4
      %s21 = int_to_ptr.vmem [resolvable:$true] %s20
      %26 = dma.hbm_to_vmem [thread:$0]  %s0, 512, %s21, [#allocation3], 128, 128, 8
    $region5: #{tpu_custom_call.1} parent=1 // pred_fallthru
      _
    // Predicated region
    $region6: #{tpu_custom_call.1} parent=1 // pred_check
      _
    $region7: #{tpu_custom_call.1} parent=1 // pred_check_branch
      %28 = sbr.rel (0) target = $region9
    $region8: #{tpu_custom_call.1} parent=1 // pred_region
      %s30 = ssub.s32 256, 256
      %31 = vsyncadd [#allocation6], %s30
      %s32 = sshll.u32 [#allocation5], 4
      %s33 = int_to_ptr.vmem [resolvable:$true] %s32
      %38 = dma.hbm_to_vmem [thread:$0]  %s1, 256, %s33, [#allocation6], 64, 64, 4
    $region9: #{tpu_custom_call.1} parent=1 // pred_fallthru
      _
    // Predicated region
    $region10: #{tpu_custom_call.1} parent=1 // pred_check
      _
    $region11: #{tpu_custom_call.1} parent=1 // pred_check_branch
      %40 = sbr.rel (0) target = $region13
    $region12: #{tpu_custom_call.1} parent=1 // pred_region
      %s42 = ssub.s32 1024, 1024
      %43 = vsyncadd [#allocation6], %s42
      %s44 = sshll.u32 [#allocation7], 4
      %s45 = int_to_ptr.vmem [resolvable:$true] %s44
      %50 = dma.hbm_to_vmem [thread:$0]  %s2, 1024, %s45, [#allocation6], 128, 128, 8
    $region13: #{tpu_custom_call.1} parent=1 // pred_fallthru
      _
    // Predicated region
    $region14: #{tpu_custom_call.1} parent=1 // pred_check
      _
    $region15: #{tpu_custom_call.1} parent=1 // pred_check_branch
      %52 = sbr.rel (0) target = $region17
    $region16: #{tpu_custom_call.1} parent=1 // pred_region
      %s54 = ssub.s32 512, 512
      %55 = vsyncadd [#allocation9], %s54
      %s56 = sshll.u32 [#allocation8], 4
      %s57 = int_to_ptr.vmem [resolvable:$true] %s56
      %62 = dma.hbm_to_vmem [thread:$0]  %s3, 512, %s57, [#allocation9], 64, 64, 4
    $region17: #{tpu_custom_call.1} parent=1 // pred_fallthru
      _
    // Predicated region
    $region18: #{tpu_custom_call.1} parent=1 // pred_check
      _
    $region19: #{tpu_custom_call.1} parent=1 // pred_check_branch
      %64 = sbr.rel (0) target = $region21
    $region20: #{tpu_custom_call.1} parent=1 // pred_region
      %s66 = ssub.s32 128, 128
      %67 = vsyncadd [#allocation9], %s66
      %s68 = sshll.u32 [#allocation10], 4
      %s69 = int_to_ptr.vmem [resolvable:$true] %s68
      %74 = dma.hbm_to_vmem [thread:$0]  %s4, 128, %s69, [#allocation9], 64, 64, 4
    $region21: #{tpu_custom_call.1} parent=1 // pred_fallthru
      _
    // Predicated region
    $region22: #{tpu_custom_call.1} parent=1 // pred_check
      _
    $region23: #{tpu_custom_call.1} parent=1 // pred_check_branch
      %76 = sbr.rel (0) target = $region25
    $region24: #{tpu_custom_call.1} parent=1 // pred_region
      _
    $region25: #{tpu_custom_call.1} parent=1 // pred_fallthru
      _
    // Predicated region
    $region26: #{tpu_custom_call.1} parent=1 // pred_check
      _
    $region27: #{tpu_custom_call.1} parent=1 // pred_check_branch
      %78 = sbr.rel (0) target = $region29
    $region28: #{tpu_custom_call.1} parent=1 // pred_region
      %79 = dma.done [#allocation3], 512
    $region29: #{tpu_custom_call.1} parent=1 // pred_fallthru
      _
    // Predicated region
    $region30: #{tpu_custom_call.1} parent=1 // pred_check
      _
    $region31: #{tpu_custom_call.1} parent=1 // pred_check_branch
      %81 = sbr.rel (0) target = $region33
    $region32: #{tpu_custom_call.1} parent=1 // pred_region
      %82 = dma.done [#allocation6], 256
    $region33: #{tpu_custom_call.1} parent=1 // pred_fallthru
      _
    // Predicated region
    $region34: #{tpu_custom_call.1} parent=1 // pred_check
      _
    $region35: #{tpu_custom_call.1} parent=1 // pred_check_branch
      %84 = sbr.rel (0) target = $region37
    $region36: #{tpu_custom_call.1} parent=1 // pred_region
      %85 = dma.done [#allocation6], 1024
    $region37: #{tpu_custom_call.1} parent=1 // pred_fallthru
      _
    // Predicated region
    $region38: #{tpu_custom_call.1} parent=1 // pred_check
      _
    $region39: #{tpu_custom_call.1} parent=1 // pred_check_branch
      %87 = sbr.rel (0) target = $region41
    $region40: #{tpu_custom_call.1} parent=1 // pred_region
      %88 = dma.done [#allocation9], 512
    $region41: #{tpu_custom_call.1} parent=1 // pred_fallthru
      _
    // Predicated region
    $region42: #{tpu_custom_call.1} parent=1 // pred_check
      _
    $region43: #{tpu_custom_call.1} parent=1 // pred_check_branch
      %90 = sbr.rel (0) target = $region45
    $region44: #{tpu_custom_call.1} parent=1 // pred_region
      %91 = dma.done [#allocation9], 128
    $region45: #{tpu_custom_call.1} parent=1 // pred_fallthru
      _
    %v93 = vld [vmem:[#allocation2] sm:$0xff]
    %v94 = vld [vmem:[#allocation2 + $0x8] sm:$0xff]
    %v95 = vld [vmem:[#allocation2 + $0x10] sm:$0xff]
    %v96 = vld [vmem:[#allocation2 + $0x18] sm:$0xff]
    %v97 = vpack.c.bf16 %v94, %v93
    %v98 = vpack.c.bf16 %v96, %v95
    %v99 = vld [vmem:[#allocation5] sm:$0xf]
    %v100 = vld [vmem:[#allocation5 + $0x4] sm:$0xf]
    %v101 = vld [vmem:[#allocation5 + $0x8] sm:$0xf]
    %v102 = vld [vmem:[#allocation5 + $0xc] sm:$0xf]
    %v103 = vld [vmem:[%s5] ss:$0 sm:$0xff]
    %v108 = vunpack.c.l.b16 %v99
    %v109 = vunpack.c.l.b16 %v100
    %v110 = vunpack.c.l.b16 %v101
    %v111 = vunpack.c.l.b16 %v102
    %v112 = vpack.c.b16 %v109, %v108
    %v113 = vpack.c.b16 %v111, %v110
    %vm116 = vcmask 261120
    %v118 = vsel %vm116, %v97, 0
    %v121 = vsel %vm116, %v98, 0
    %123 = vmatprep.subr.bf16.mxu0 0
    %124 = vmatpush1.bf16.msra.mxu0 %v112
    %125 = vmatprep.subr.bf16.mxu0 0
    %126 = vmatpush1.bf16.msra.mxu0 %v113
    %127 = vmatprep.subr.bf16.mxu0 0
    %128 = vmatpush1.bf16.msra.mxu0 0
    %129 = vmatprep.subr.bf16.mxu0 0
    %130 = vmatpush1.bf16.msra.mxu0 0
    %131 = vmatprep.subr.bf16.mxu0 0
    %132 = vmatpush1.bf16.msra.mxu0 0
    %133 = vmatprep.subr.bf16.mxu0 0
    %134 = vmatpush1.bf16.msra.mxu0 0
    %135 = vmatprep.subr.bf16.mxu0 0
    %136 = vmatpush1.bf16.msra.mxu0 0
    %137 = vmatprep.subr.bf16.mxu0 0
    %138 = vmatpush1.bf16.msra.mxu0 0
    %139 = vmatprep.subr.bf16.mxu0 0
    %140 = vmatpush1.bf16.msra.mxu0 0
    %141 = vmatprep.subr.bf16.mxu0 0
    %142 = vmatpush1.bf16.msra.mxu0 0
    %143 = vmatprep.subr.bf16.mxu0 0
    %144 = vmatpush1.bf16.msra.mxu0 0
    %145 = vmatprep.subr.bf16.mxu0 0
    %146 = vmatpush1.bf16.msra.mxu0 0
    %147 = vmatprep.subr.bf16.mxu0 0
    %148 = vmatpush1.bf16.msra.mxu0 0
    %149 = vmatprep.subr.bf16.mxu0 0
    %150 = vmatpush1.bf16.msra.mxu0 0
    %151 = vmatprep.subr.bf16.mxu0 0
    %152 = vmatpush1.bf16.msra.mxu0 0
    %153 = vmatprep.subr.bf16.mxu0 0
    %154 = vmatpush1.bf16.msra.mxu0 0
    %155 = vmatprep.mubr.bf16.mxu0 0
    %156 = vmatmul.mubr.bf16.gmra.mrb[0].mxu0 %v118
    %v157 = vpop.f32.mrb[0].mxu0
    %v158 = vadd.f32 %v103, %v157
    %v159 = vpop.f32.mrb[0].mxu0
    %v160 = vpop.f32.mrb[0].mxu0
    %v161 = vadd.f32 %v103, %v160
    %v162 = vpop.f32.mrb[0].mxu0
    %163 = vmatprep.mubr.bf16.mxu0 0
    %164 = vmatmul.mubr.bf16.gmra.mrb[0].mxu0 %v121
    %v165 = vpop.f32.mrb[0].mxu0
    %v166 = vadd.f32 %v103, %v165
    %v167 = vpop.f32.mrb[0].mxu0
    %v168 = vpop.f32.mrb[0].mxu0
    %v169 = vadd.f32 %v103, %v168
    %v170 = vpop.f32.mrb[0].mxu0
    %171 = vdwg.mxu0
    %v172 = vmax.f32 %v158, 0.0
    %v173 = vmax.f32 %v161, 0.0
    %v174 = vmax.f32 %v166, 0.0
    %v175 = vmax.f32 %v169, 0.0
    %v176 = vpack.c.bf16 %v173, %v172
    %v177 = vpack.c.bf16 %v175, %v174
    %v178 = vld [vmem:[#allocation7] sm:$0xff]
    %v179 = vld [vmem:[#allocation7 + $0x8] sm:$0xff]
    %v180 = vld [vmem:[#allocation7 + $0x10] sm:$0xff]
    %v181 = vld [vmem:[#allocation7 + $0x18] sm:$0xff]
    %v182 = vld [vmem:[#allocation7 + $0x20] sm:$0xff]
    %v183 = vld [vmem:[#allocation7 + $0x28] sm:$0xff]
    %v184 = vld [vmem:[#allocation7 + $0x30] sm:$0xff]
    %v185 = vld [vmem:[#allocation7 + $0x38] sm:$0xff]
    %s186 = scalar_lea.vmem %s5, 1
    %v187 = vld [vmem:[%s186] ss:$8 sm:$0x3]
    %v189 = vlaneseq
    %v190 = vshrl.u32 %v189, 7
    %v191 = vsub.s32 0, %v190
    %v192 = vrot.slane %v187, %v191
    %v193 = vlaneseq
    %v194 = vshrl.u32 %v193, 7
    %v195 = vsub.s32 1, %v194
    %v196 = vrot.slane %v187, %v195
    %v207 = vunpack.c.l.b16 %v178
    %v208 = vunpack.c.h.b16 %v178
    %v209 = vunpack.c.l.b16 %v179
    %v210 = vunpack.c.h.b16 %v179
    %v211 = vunpack.c.l.b16 %v180
    %v212 = vunpack.c.h.b16 %v180
    %v213 = vunpack.c.l.b16 %v181
    %v214 = vunpack.c.h.b16 %v181
    %v215 = vunpack.c.l.b16 %v182
    %v216 = vunpack.c.h.b16 %v182
    %v217 = vunpack.c.l.b16 %v183
    %v218 = vunpack.c.h.b16 %v183
    %v219 = vunpack.c.l.b16 %v184
    %v220 = vunpack.c.h.b16 %v184
    %v221 = vunpack.c.l.b16 %v185
    %v222 = vunpack.c.h.b16 %v185
    %v223 = vpack.c.b16 %v209, %v207
    %v224 = vpack.c.b16 %v210, %v208
    %v225 = vpack.c.b16 %v213, %v211
    %v226 = vpack.c.b16 %v214, %v212
    %v227 = vpack.c.b16 %v217, %v215
    %v228 = vpack.c.b16 %v218, %v216
    %v229 = vpack.c.b16 %v221, %v219
    %v230 = vpack.c.b16 %v222, %v220
    %vm239 = vcmask 523264
    %v241 = vsel %vm239, %v176, 0
    %v244 = vsel %vm239, %v177, 0
    %246 = vmatprep.subr.bf16.mxu0 %v224
    %247 = vmatpush1.bf16.msra.mxu0 %v223
    %248 = vmatprep.subr.bf16.mxu0 %v226
    %249 = vmatpush1.bf16.msra.mxu0 %v225
    %250 = vmatprep.subr.bf16.mxu0 %v228
    %251 = vmatpush1.bf16.msra.mxu0 %v227
    %252 = vmatprep.subr.bf16.mxu0 %v230
    %253 = vmatpush1.bf16.msra.mxu0 %v229
    %254 = vmatprep.subr.bf16.mxu0 0
    %255 = vmatpush1.bf16.msra.mxu0 0
    %256 = vmatprep.subr.bf16.mxu0 0
    %257 = vmatpush1.bf16.msra.mxu0 0
    %258 = vmatprep.subr.bf16.mxu0 0
    %259 = vmatpush1.bf16.msra.mxu0 0
    %260 = vmatprep.subr.bf16.mxu0 0
    %261 = vmatpush1.bf16.msra.mxu0 0
    %262 = vmatprep.subr.bf16.mxu0 0
    %263 = vmatpush1.bf16.msra.mxu0 0
    %264 = vmatprep.subr.bf16.mxu0 0
    %265 = vmatpush1.bf16.msra.mxu0 0
    %266 = vmatprep.subr.bf16.mxu0 0
    %267 = vmatpush1.bf16.msra.mxu0 0
    %268 = vmatprep.subr.bf16.mxu0 0
    %269 = vmatpush1.bf16.msra.mxu0 0
    %270 = vmatprep.subr.bf16.mxu0 0
    %271 = vmatpush1.bf16.msra.mxu0 0
    %272 = vmatprep.subr.bf16.mxu0 0
    %273 = vmatpush1.bf16.msra.mxu0 0
    %274 = vmatprep.subr.bf16.mxu0 0
    %275 = vmatpush1.bf16.msra.mxu0 0
    %276 = vmatprep.subr.bf16.mxu0 0
    %277 = vmatpush1.bf16.msra.mxu0 0
    %278 = vmatprep.mubr.bf16.mxu0 0
    %279 = vmatmul.mubr.bf16.gmra.mrb[0].mxu0 %v241
    %v280 = vpop.f32.mrb[0].mxu0
    %v281 = vadd.f32 %v192, %v280
    %v282 = vpop.f32.mrb[0].mxu0
    %v283 = vadd.f32 %v196, %v282
    %v284 = vpop.f32.mrb[0].mxu0
    %v285 = vadd.f32 %v192, %v284
    %v286 = vpop.f32.mrb[0].mxu0
    %v287 = vadd.f32 %v196, %v286
    %288 = vmatprep.mubr.bf16.mxu0 0
    %289 = vmatmul.mubr.bf16.gmra.mrb[0].mxu0 %v244
    %v290 = vpop.f32.mrb[0].mxu0
    %v291 = vadd.f32 %v192, %v290
    %v292 = vpop.f32.mrb[0].mxu0
    %v293 = vadd.f32 %v196, %v292
    %v294 = vpop.f32.mrb[0].mxu0
    %v295 = vadd.f32 %v192, %v294
    %v296 = vpop.f32.mrb[0].mxu0
    %v297 = vadd.f32 %v196, %v296
    %298 = vdwg.mxu0
    %v299 = vmul.f32 %v281, %v93
    %v300 = vmul.f32 %v285, %v94
    %v301 = vmul.f32 %v291, %v95
    %v302 = vmul.f32 %v295, %v96
    %v303 = vpack.c.bf16 %v300, %v299
    %v304 = vpack.c.bf16 %v302, %v301
    %v305 = vld [vmem:[#allocation8] sm:$0xf]
    %v306 = vld [vmem:[#allocation8 + $0x4] sm:$0xf]
    %v307 = vld [vmem:[#allocation8 + $0x8] sm:$0xf]
    %v308 = vld [vmem:[#allocation8 + $0xc] sm:$0xf]
    %v313 = vunpack.c.l.b16 %v305
    %v314 = vunpack.c.l.b16 %v306
    %v315 = vunpack.c.l.b16 %v307
    %v316 = vunpack.c.l.b16 %v308
    %v317 = vpack.c.b16 %v314, %v313
    %v318 = vpack.c.b16 %v316, %v315
    %v322 = vsel %vm116, %v303, 0
    %v325 = vsel %vm116, %v304, 0
    %327 = vmatprep.subr.bf16.mxu0 0
    %328 = vmatpush1.bf16.msra.mxu0 %v317
    %329 = vmatprep.subr.bf16.mxu0 0
    %330 = vmatpush1.bf16.msra.mxu0 %v318
    %331 = vmatprep.subr.bf16.mxu0 0
    %332 = vmatpush1.bf16.msra.mxu0 0
    %333 = vmatprep.subr.bf16.mxu0 0
    %334 = vmatpush1.bf16.msra.mxu0 0
    %335 = vmatprep.subr.bf16.mxu0 0
    %336 = vmatpush1.bf16.msra.mxu0 0
    %337 = vmatprep.subr.bf16.mxu0 0
    %338 = vmatpush1.bf16.msra.mxu0 0
    %339 = vmatprep.subr.bf16.mxu0 0
    %340 = vmatpush1.bf16.msra.mxu0 0
    %341 = vmatprep.subr.bf16.mxu0 0
    %342 = vmatpush1.bf16.msra.mxu0 0
    %343 = vmatprep.subr.bf16.mxu0 0
    %344 = vmatpush1.bf16.msra.mxu0 0
    %345 = vmatprep.subr.bf16.mxu0 0
    %346 = vmatpush1.bf16.msra.mxu0 0
    %347 = vmatprep.subr.bf16.mxu0 0
    %348 = vmatpush1.bf16.msra.mxu0 0
    %349 = vmatprep.subr.bf16.mxu0 0
    %350 = vmatpush1.bf16.msra.mxu0 0
    %351 = vmatprep.subr.bf16.mxu0 0
    %352 = vmatpush1.bf16.msra.mxu0 0
    %353 = vmatprep.subr.bf16.mxu0 0
    %354 = vmatpush1.bf16.msra.mxu0 0
    %355 = vmatprep.subr.bf16.mxu0 0
    %356 = vmatpush1.bf16.msra.mxu0 0
    %357 = vmatprep.subr.bf16.mxu0 0
    %358 = vmatpush1.bf16.msra.mxu0 0
    %359 = vmatprep.mubr.bf16.mxu0 0
    %360 = vmatmul.mubr.bf16.gmra.mrb[0].mxu0 %v322
    %v361 = vpop.f32.mrb[0].mxu0
    %v362 = vadd.f32 0.0, %v361
    %v363 = vpop.f32.mrb[0].mxu0
    %v364 = vpop.f32.mrb[0].mxu0
    %v365 = vadd.f32 0.0, %v364
    %v366 = vpop.f32.mrb[0].mxu0
    %367 = vmatprep.mubr.bf16.mxu0 0
    %368 = vmatmul.mubr.bf16.gmra.mrb[0].mxu0 %v325
    %v369 = vpop.f32.mrb[0].mxu0
    %v370 = vadd.f32 0.0, %v369
    %v371 = vpop.f32.mrb[0].mxu0
    %v372 = vpop.f32.mrb[0].mxu0
    %v373 = vadd.f32 0.0, %v372
    %v374 = vpop.f32.mrb[0].mxu0
    %375 = vdwg.mxu0
    %v376 = vsel %vm116, %v362, 0.0
    %377 = vadd.xlane.f32.xlu0 %v376
    %v378 = vpop.xlane.xlu0 %377
    %v379 = vsel %vm116, %v365, 0.0
    %380 = vadd.xlane.f32.xlu0 %v379
    %v381 = vpop.xlane.xlu0 %380
    %v382 = vsel %vm116, %v370, 0.0
    %383 = vadd.xlane.f32.xlu0 %v382
    %v384 = vpop.xlane.xlu0 %383
    %v385 = vsel %vm116, %v373, 0.0
    %386 = vadd.xlane.f32.xlu0 %v385
    %v387 = vpop.xlane.xlu0 %386
    %v388 = vmul.f32 %v378, 0.03125
    %v389 = vmul.f32 %v381, 0.03125
    %v390 = vmul.f32 %v384, 0.03125
    %v391 = vmul.f32 %v387, 0.03125
    %v392 = vmul.f32 %v362, %v362
    %v393 = vmul.f32 %v365, %v365
    %v394 = vmul.f32 %v370, %v370
    %v395 = vmul.f32 %v373, %v373
    %v396 = vsel %vm116, %v392, 0.0
    %397 = vadd.xlane.f32.xlu0 %v396
    %v398 = vpop.xlane.xlu0 %397
    %v399 = vsel %vm116, %v393, 0.0
    %400 = vadd.xlane.f32.xlu0 %v399
    %v401 = vpop.xlane.xlu0 %400
    %v402 = vsel %vm116, %v394, 0.0
    %403 = vadd.xlane.f32.xlu0 %v402
    %v404 = vpop.xlane.xlu0 %403
    %v405 = vsel %vm116, %v395, 0.0
    %406 = vadd.xlane.f32.xlu0 %v405
    %v407 = vpop.xlane.xlu0 %406
    %v408 = vmul.f32 %v398, 0.03125
    %v409 = vmul.f32 %v401, 0.03125
    %v410 = vmul.f32 %v404, 0.03125
    %v411 = vmul.f32 %v407, 0.03125
    %v412 = vmul.f32 %v388, %v388
    %v413 = vmul.f32 %v389, %v389
    %v414 = vmul.f32 %v390, %v390
    %v415 = vmul.f32 %v391, %v391
    %v416 = vsub.f32 %v408, %v412
    %v417 = vsub.f32 %v409, %v413
    %v418 = vsub.f32 %v410, %v414
    %v419 = vsub.f32 %v411, %v415
    %v420 = vmax.f32 %v416, 0.0
    %v421 = vmax.f32 %v417, 0.0
    %v422 = vmax.f32 %v418, 0.0
    %v423 = vmax.f32 %v419, 0.0
    %v424 = vsub.f32 %v362, %v388
    %v425 = vsub.f32 %v365, %v389
    %v426 = vsub.f32 %v370, %v390
    %v427 = vsub.f32 %v373, %v391
    %v428 = vadd.f32 %v420, 1e-05
    %v429 = vadd.f32 %v421, 1e-05
    %v430 = vadd.f32 %v422, 1e-05
    %v431 = vadd.f32 %v423, 1e-05
    %v432 = vrsqrt.pop %v428
    %v433 = vrsqrt.pop %v429
    %v434 = vrsqrt.pop %v430
    %v435 = vrsqrt.pop %v431
    %v436 = vmul.f32 %v424, %v432
    %v437 = vmul.f32 %v425, %v433
    %v438 = vmul.f32 %v426, %v434
    %v439 = vmul.f32 %v427, %v435
    %v440 = vld [vmem:[%s5 + $0x2] ss:$0 sm:$0xff]
    %v441 = vld [vmem:[%s5 + $0x3] ss:$0 sm:$0xff]
    %v442 = vmul.f32 %v436, %v440
    %v443 = vmul.f32 %v437, %v440
    %v444 = vmul.f32 %v438, %v440
    %v445 = vmul.f32 %v439, %v440
    %v446 = vadd.f32 %v442, %v441
    %v447 = vadd.f32 %v443, %v441
    %v448 = vadd.f32 %v444, %v441
    %v449 = vadd.f32 %v445, %v441
    %v450 = vmax.f32 %v446, 0.0
    %v451 = vmax.f32 %v447, 0.0
    %v452 = vmax.f32 %v448, 0.0
    %v453 = vmax.f32 %v449, 0.0
    %v454 = vmul.f32 %v283, %v450
    %v455 = vmul.f32 %v287, %v451
    %v456 = vmul.f32 %v293, %v452
    %v457 = vmul.f32 %v297, %v453
    %v458 = vpack.c.bf16 %v455, %v454
    %v459 = vpack.c.bf16 %v457, %v456
    %s460 = scalar_lea.vmem [#allocation8], 16
    %v461 = vld [vmem:[%s460] sm:$0xf]
    %v462 = vld [vmem:[%s460 + $0x4] sm:$0xf]
    %v463 = vld [vmem:[%s460 + $0x8] sm:$0xf]
    %v464 = vld [vmem:[%s460 + $0xc] sm:$0xf]
    %v469 = vunpack.c.l.b16 %v461
    %v470 = vunpack.c.l.b16 %v462
    %v471 = vunpack.c.l.b16 %v463
    %v472 = vunpack.c.l.b16 %v464
    %v473 = vpack.c.b16 %v470, %v469
    %v474 = vpack.c.b16 %v472, %v471
    %v478 = vsel %vm116, %v458, 0
    %v481 = vsel %vm116, %v459, 0
    %483 = vmatprep.subr.bf16.mxu0 0
    %484 = vmatpush1.bf16.msra.mxu0 %v473
    %485 = vmatprep.subr.bf16.mxu0 0
    %486 = vmatpush1.bf16.msra.mxu0 %v474
    %487 = vmatprep.subr.bf16.mxu0 0
    %488 = vmatpush1.bf16.msra.mxu0 0
    %489 = vmatprep.subr.bf16.mxu0 0
    %490 = vmatpush1.bf16.msra.mxu0 0
    %491 = vmatprep.subr.bf16.mxu0 0
    %492 = vmatpush1.bf16.msra.mxu0 0
    %493 = vmatprep.subr.bf16.mxu0 0
    %494 = vmatpush1.bf16.msra.mxu0 0
    %495 = vmatprep.subr.bf16.mxu0 0
    %496 = vmatpush1.bf16.msra.mxu0 0
    %497 = vmatprep.subr.bf16.mxu0 0
    %498 = vmatpush1.bf16.msra.mxu0 0
    %499 = vmatprep.subr.bf16.mxu0 0
    %500 = vmatpush1.bf16.msra.mxu0 0
    %501 = vmatprep.subr.bf16.mxu0 0
    %502 = vmatpush1.bf16.msra.mxu0 0
    %503 = vmatprep.subr.bf16.mxu0 0
    %504 = vmatpush1.bf16.msra.mxu0 0
    %505 = vmatprep.subr.bf16.mxu0 0
    %506 = vmatpush1.bf16.msra.mxu0 0
    %507 = vmatprep.subr.bf16.mxu0 0
    %508 = vmatpush1.bf16.msra.mxu0 0
    %509 = vmatprep.subr.bf16.mxu0 0
    %510 = vmatpush1.bf16.msra.mxu0 0
    %511 = vmatprep.subr.bf16.mxu0 0
    %512 = vmatpush1.bf16.msra.mxu0 0
    %513 = vmatprep.subr.bf16.mxu0 0
    %514 = vmatpush1.bf16.msra.mxu0 0
    %515 = vmatprep.mubr.bf16.mxu0 0
    %516 = vmatmul.mubr.bf16.gmra.mrb[0].mxu0 %v478
    %v517 = vpop.f32.mrb[0].mxu0
    %v518 = vadd.f32 0.0, %v517
    %v519 = vpop.f32.mrb[0].mxu0
    %v520 = vpop.f32.mrb[0].mxu0
    %v521 = vadd.f32 0.0, %v520
    %v522 = vpop.f32.mrb[0].mxu0
    %523 = vmatprep.mubr.bf16.mxu0 0
    %524 = vmatmul.mubr.bf16.gmra.mrb[0].mxu0 %v481
    %v525 = vpop.f32.mrb[0].mxu0
    %v526 = vadd.f32 0.0, %v525
    %v527 = vpop.f32.mrb[0].mxu0
    %v528 = vpop.f32.mrb[0].mxu0
    %v529 = vadd.f32 0.0, %v528
    %v530 = vpop.f32.mrb[0].mxu0
    %531 = vdwg.mxu0
    %vm532 = vcmask 130048
    %v533 = vsel %vm532, %v518, 0.0
    %534 = vadd.xlane.f32.xlu0 %v533
    %v535 = vpop.xlane.xlu0 %534
    %v536 = vsel %vm532, %v521, 0.0
    %537 = vadd.xlane.f32.xlu0 %v536
    %v538 = vpop.xlane.xlu0 %537
    %v539 = vsel %vm532, %v526, 0.0
    %540 = vadd.xlane.f32.xlu0 %v539
    %v541 = vpop.xlane.xlu0 %540
    %v542 = vsel %vm532, %v529, 0.0
    %543 = vadd.xlane.f32.xlu0 %v542
    %v544 = vpop.xlane.xlu0 %543
    %v545 = vmul.f32 %v535, 0.0625
    %v546 = vmul.f32 %v538, 0.0625
    %v547 = vmul.f32 %v541, 0.0625
    %v548 = vmul.f32 %v544, 0.0625
    %v549 = vmul.f32 %v518, %v518
    %v550 = vmul.f32 %v521, %v521
    %v551 = vmul.f32 %v526, %v526
    %v552 = vmul.f32 %v529, %v529
    %v553 = vsel %vm532, %v549, 0.0
    %554 = vadd.xlane.f32.xlu0 %v553
    %v555 = vpop.xlane.xlu0 %554
    %v556 = vsel %vm532, %v550, 0.0
    %557 = vadd.xlane.f32.xlu0 %v556
    %v558 = vpop.xlane.xlu0 %557
    %v559 = vsel %vm532, %v551, 0.0
    %560 = vadd.xlane.f32.xlu0 %v559
    %v561 = vpop.xlane.xlu0 %560
    %v562 = vsel %vm532, %v552, 0.0
    %563 = vadd.xlane.f32.xlu0 %v562
    %v564 = vpop.xlane.xlu0 %563
    %v565 = vmul.f32 %v555, 0.0625
    %v566 = vmul.f32 %v558, 0.0625
    %v567 = vmul.f32 %v561, 0.0625
    %v568 = vmul.f32 %v564, 0.0625
    %v569 = vmul.f32 %v545, %v545
    %v570 = vmul.f32 %v546, %v546
    %v571 = vmul.f32 %v547, %v547
    %v572 = vmul.f32 %v548, %v548
    %v573 = vsub.f32 %v565, %v569
    %v574 = vsub.f32 %v566, %v570
    %v575 = vsub.f32 %v567, %v571
    %v576 = vsub.f32 %v568, %v572
    %v577 = vmax.f32 %v573, 0.0
    %v578 = vmax.f32 %v574, 0.0
    %v579 = vmax.f32 %v575, 0.0
    %v580 = vmax.f32 %v576, 0.0
    %v581 = vsub.f32 %v518, %v545
    %v582 = vsub.f32 %v521, %v546
    %v583 = vsub.f32 %v526, %v547
    %v584 = vsub.f32 %v529, %v548
    %v585 = vadd.f32 %v577, 1e-05
    %v586 = vadd.f32 %v578, 1e-05
    %v587 = vadd.f32 %v579, 1e-05
    %v588 = vadd.f32 %v580, 1e-05
    %v589 = vrsqrt.pop %v585
    %v590 = vrsqrt.pop %v586
    %v591 = vrsqrt.pop %v587
    %v592 = vrsqrt.pop %v588
    %v593 = vmul.f32 %v581, %v589
    %v594 = vmul.f32 %v582, %v590
    %v595 = vmul.f32 %v583, %v591
    %v596 = vmul.f32 %v584, %v592
    %v597 = vld [vmem:[%s5 + $0x4] ss:$0 sm:$0xff]
    %v598 = vld [vmem:[%s5 + $0x5] ss:$0 sm:$0xff]
    %v599 = vmul.f32 %v593, %v597
    %v600 = vmul.f32 %v594, %v597
    %v601 = vmul.f32 %v595, %v597
    %v602 = vmul.f32 %v596, %v597
    %v603 = vadd.f32 %v599, %v598
    %v604 = vadd.f32 %v600, %v598
    %v605 = vadd.f32 %v601, %v598
    %v606 = vadd.f32 %v602, %v598
    %v607 = vmax.f32 %v603, 0.0
    %v608 = vmax.f32 %v604, 0.0
    %v609 = vmax.f32 %v605, 0.0
    %v610 = vmax.f32 %v606, 0.0
    %v611 = vpack.c.bf16 %v608, %v607
    %v612 = vpack.c.bf16 %v610, %v609
    %v613 = vld [vmem:[#allocation10] sm:$0xf]
    %v614 = vld [vmem:[#allocation10 + $0x4] sm:$0xf]
    %v615 = vld [vmem:[%s5 + $0x6] ss:$0 sm:$0xff]
    %v618 = vunpack.c.l.b16 %v613
    %v619 = vunpack.c.l.b16 %v614
    %v620 = vpack.c.b16 %v619, %v618
    %v623 = vsel %vm532, %v611, 0
    %v626 = vsel %vm532, %v612, 0
    %628 = vmatprep.subr.bf16.mxu0 0
    %629 = vmatpush1.bf16.msra.mxu0 %v620
    %630 = vmatprep.subr.bf16.mxu0 0
    %631 = vmatpush1.bf16.msra.mxu0 0
    %632 = vmatprep.subr.bf16.mxu0 0
    %633 = vmatpush1.bf16.msra.mxu0 0
    %634 = vmatprep.subr.bf16.mxu0 0
    %635 = vmatpush1.bf16.msra.mxu0 0
    %636 = vmatprep.subr.bf16.mxu0 0
    %637 = vmatpush1.bf16.msra.mxu0 0
    %638 = vmatprep.subr.bf16.mxu0 0
    %639 = vmatpush1.bf16.msra.mxu0 0
    %640 = vmatprep.subr.bf16.mxu0 0
    %641 = vmatpush1.bf16.msra.mxu0 0
    %642 = vmatprep.subr.bf16.mxu0 0
    %643 = vmatpush1.bf16.msra.mxu0 0
    %644 = vmatprep.subr.bf16.mxu0 0
    %645 = vmatpush1.bf16.msra.mxu0 0
    %646 = vmatprep.subr.bf16.mxu0 0
    %647 = vmatpush1.bf16.msra.mxu0 0
    %648 = vmatprep.subr.bf16.mxu0 0
    %649 = vmatpush1.bf16.msra.mxu0 0
    %650 = vmatprep.subr.bf16.mxu0 0
    %651 = vmatpush1.bf16.msra.mxu0 0
    %652 = vmatprep.subr.bf16.mxu0 0
    %653 = vmatpush1.bf16.msra.mxu0 0
    %654 = vmatprep.subr.bf16.mxu0 0
    %655 = vmatpush1.bf16.msra.mxu0 0
    %656 = vmatprep.subr.bf16.mxu0 0
    %657 = vmatpush1.bf16.msra.mxu0 0
    %658 = vmatprep.subr.bf16.mxu0 0
    %659 = vmatpush1.bf16.msra.mxu0 0
    %660 = vmatprep.mubr.bf16.mxu0 0
    %661 = vmatmul.mubr.bf16.gmra.mrb[0].mxu0 %v623
    %v662 = vpop.f32.mrb[0].mxu0
    %v663 = vadd.f32 %v615, %v662
    %v664 = vpop.f32.mrb[0].mxu0
    %v665 = vpop.f32.mrb[0].mxu0
    %v666 = vadd.f32 %v615, %v665
    %v667 = vpop.f32.mrb[0].mxu0
    %668 = vmatprep.mubr.bf16.mxu0 0
    %669 = vmatmul.mubr.bf16.gmra.mrb[0].mxu0 %v626
    %v670 = vpop.f32.mrb[0].mxu0
    %v671 = vadd.f32 %v615, %v670
    %v672 = vpop.f32.mrb[0].mxu0
    %v673 = vpop.f32.mrb[0].mxu0
    %v674 = vadd.f32 %v615, %v673
    %v675 = vpop.f32.mrb[0].mxu0
    %676 = vdwg.mxu0
    %677 = vst [vmem:[#allocation11] sm:$0xff] %v663
    %678 = vst [vmem:[#allocation11 + $0x8] sm:$0xff] %v666
    %679 = vst [vmem:[#allocation11 + $0x10] sm:$0xff] %v671
    %680 = vst [vmem:[#allocation11 + $0x18] sm:$0xff] %v674
    // Predicated region
    $region46: #{tpu_custom_call.1} parent=1 // pred_check
      _
    $region47: #{tpu_custom_call.1} parent=1 // pred_check_branch
      %682 = sbr.rel (0) target = $region49
    $region48: #{tpu_custom_call.1} parent=1 // pred_region
      %s684 = ssub.s32 512, 512
      %685 = vsyncadd [#allocation4], %s684
      %s686 = sshll.u32 [#allocation11], 4
      %s687 = int_to_ptr.vmem [resolvable:$true] %s686
      %692 = dma.vmem_to_hbm [thread:$0]  %s687, 512, %s6, [#allocation4], 128, 128, 8
    $region49: #{tpu_custom_call.1} parent=1 // pred_fallthru
      _
    // Predicated region
    $region50: #{tpu_custom_call.1} parent=1 // pred_check
      _
    $region51: #{tpu_custom_call.1} parent=1 // pred_check_branch
      %694 = sbr.rel (0) target = $region53
    $region52: #{tpu_custom_call.1} parent=1 // pred_region
      %695 = dma.done [#allocation4], 512
    $region53: #{tpu_custom_call.1} parent=1 // pred_fallthru
      _
    %696 = vsyncpa [#allocation3], 1
    %697 = vsyncpa [#allocation6], 1
    %698 = vsyncpa [#allocation9], 1
    %699 = vsyncpa [#allocation4], 1

</llo_original>
